<compile_context>
chip_gen: v7x
topology: tpu7x:2x2x1
jax: 0.10.0
libtpu: 0.0.40
codegen_flags: <defaults>
</compile_context>

<pallas_src>
import math
import functools

import jax
import jax.numpy as jnp
import numpy as np
from jax import lax
from jax.experimental import pallas as pl
from jax.experimental.pallas import tpu as pltpu


_SQRT_HALF = 1.0 / math.sqrt(2.0)


def _gelu(x, approximate=False):
    if approximate:
        # tanh-approximate GELU routes to the EUP slot (VALU relief on v6e);
        # small numeric deviation from torch's default erf GELU.
        return jax.nn.gelu(x, approximate=True)
    # exact (erf-based) GELU, matching torch.nn.GELU() default
    return 0.5 * x * (1.0 + lax.erf(x * _SQRT_HALF))


def memory_kernel(p_ref, ltm_ref,
                  wm_w_ref, wm_b_ref,
                  aw_wm_ref, aw_p_ref, a_b_ref,
                  uw_ref, u_b_ref,
                  attn_out_ref, ltm_out_ref,
                  *, matmul_dtype=jnp.bfloat16, approximate_gelu=False):
    """Fused forward for one (batch, token-tile) block, channel-major layout.

    p_ref    : (D,  TN)   perception tokens (channels x tokens)
    ltm_ref  : (MD, TN)   long-term-memory tokens
    wm_w     : (D,  MD)   1x1 conv 'wm' weight (out, in)
    aw_wm    : (D,  D)    'attn' weight, working-memory half
    aw_p     : (D,  D)    'attn' weight, perception half
    uw       : (MD, D)    'update_ltm' 1x1 conv weight
    biases   : (C, 1) columns broadcast over the token (lane) axis.
    """
    md = matmul_dtype
    gelu = functools.partial(_gelu, approximate=approximate_gelu)

    ltm_f32 = ltm_ref[...].astype(jnp.float32)           # (MD, TN)

    # working_memory = wm(ltm): (D, MD) @ (MD, TN) -> (D, TN), f32 accumulation
    wm = (jnp.dot(wm_w_ref[...].astype(md), ltm_ref[...].astype(md),
                  preferred_element_type=jnp.float32)
          + wm_b_ref[...])

    # attention = attn(GELU(cat([wm, perception], channel)))
    # The channel concat is never materialized: the attn weight is pre-split
    # into its two halves, so this is two matmuls summed in f32 (same MXU work,
    # no (2D, TN) VMEM copy / extra vreg pressure per grid step).
    g_wm = gelu(wm)
    g_p = gelu(p_ref[...].astype(jnp.float32))
    attn = (jnp.dot(aw_wm_ref[...].astype(md), g_wm.astype(md),
                    preferred_element_type=jnp.float32)
            + jnp.dot(aw_p_ref[...].astype(md), g_p.astype(md),
                      preferred_element_type=jnp.float32)
            + a_b_ref[...])                               # (D, TN)

    # ltm_new = GELU(update_ltm(attention) + ltm)   (norm_ltm is Identity)
    upd = (jnp.dot(uw_ref[...].astype(md), attn.astype(md),
                   preferred_element_type=jnp.float32)
           + u_b_ref[...])                                # (MD, TN)
    ltm_new = gelu(upd + ltm_f32)

    attn_out_ref[...] = attn.astype(attn_out_ref.dtype)
    ltm_out_ref[...] = ltm_new.astype(ltm_out_ref.dtype)


def _pick_token_tile(n_pad, d, md, in_itemsize, out_itemsize, *,
                     max_token_tile, vmem_tile_budget, batch,
                     min_parallel_steps=2):
    """Largest 128-multiple token tile that fits the VMEM budget, while keeping
    at least `min_parallel_steps` parallel grid steps (v7x has 2 TensorCores)."""
    # double-buffered input + output token blocks, per token
    per_tok = 2 * (d + md) * (in_itemsize + out_itemsize)
    # f32 in-kernel intermediates (wm / gelu / attn / upd / ltm_new), per token
    per_tok += (3 * d + 2 * md) * 4
    # resident (single-buffered) weights + biases, f32
    weight_bytes = 4 * (d * md + 2 * d * d + md * d + 2 * d + md)
    avail = max(vmem_tile_budget - weight_bytes, 256 * 1024)

    tn = 128
    while (tn * 2 <= max_token_tile and n_pad % (tn * 2) == 0
           and (tn * 2) * per_tok <= avail):
        tn *= 2
    # Megacore: make sure both TensorCores on v7x get work.
    while (batch * (n_pad // tn) < min_parallel_steps and tn > 128
           and n_pad % (tn // 2) == 0):
        tn //= 2
    return tn, weight_bytes, per_tok


def memory_forward(perception_nchw, ltm_nchw, params, *,
                   max_token_tile=2048,
                   matmul_dtype=jnp.bfloat16,
                   approximate_gelu=False,
                   vmem_tile_budget=24 << 20):
    """params: wm_w (D,MD), wm_b (D,1), aw (D,2D) [cols = wm|perception],
    a_b (D,1), uw (MD,D), u_b (MD,1)."""
    B, D, H, W = perception_nchw.shape
    _, MD, _, _ = ltm_nchw.shape
    N = H * W

    # NCHW -> (B, C, tokens): pure reshape, no transpose / extra HBM pass.
    p = perception_nchw.reshape(B, D, N)
    l = ltm_nchw.reshape(B, MD, N)

    # Pad the token (lane) axis to a multiple of 128 so every store is a
    # full-width unmasked vst; padded tokens are sliced off afterwards.
    n_pad = ((N + 127) // 128) * 128
    if n_pad != N:
        pad = ((0, 0), (0, 0), (0, n_pad - N))
        p = jnp.pad(p, pad)
        l = jnp.pad(l, pad)

    in_isz = jnp.dtype(perception_nchw.dtype).itemsize
    out_isz = in_isz
    tn, weight_bytes, per_tok = _pick_token_tile(
        n_pad, D, MD, in_isz, out_isz,
        max_token_tile=max_token_tile, vmem_tile_budget=vmem_tile_budget,
        batch=B)
    grid = (B, n_pad // tn)

    # Raise the scoped VMEM limit (v5e default is only 16 MiB) but stay well
    # under v7x's 64 MiB physical VMEM.
    vmem_limit = int(min(48 << 20, max(32 << 20,
                                       2 * (weight_bytes + tn * per_tok))))

    # Split the 'attn' weight into its [wm | perception] halves once (tiny).
    aw = params["aw"]
    aw_wm, aw_p = aw[:, :D], aw[:, D:]

    # Advisory cost estimate so XLA schedules neighbors around the custom call.
    flops = 2 * B * n_pad * (MD * D + 2 * D * D + D * MD)
    transcendentals = B * n_pad * (2 * D + MD)            # 3 GELUs
    bytes_accessed = (in_isz * B * n_pad * (D + MD)
                      + out_isz * B * n_pad * (D + MD)
                      + 4 * (D * MD + 2 * D * D + MD * D + 2 * D + MD))
    cost = pl.CostEstimate(flops=flops, transcendentals=transcendentals,
                           bytes_accessed=bytes_accessed)

    kernel = functools.partial(memory_kernel, matmul_dtype=matmul_dtype,
                               approximate_gelu=approximate_gelu)

    tok_spec = lambda C: pl.BlockSpec((pl.Squeezed(), C, tn),
                                      lambda b, t: (b, 0, t))

    def _call(single_buffer_weights):
        if single_buffer_weights:
            # Weights/biases have a constant index_map -> keep them resident
            # single-buffered (halves their VMEM footprint vs default 2-deep).
            w_spec = lambda r, c: pl.BlockSpec((r, c), lambda b, t: (0, 0),
                                               pipeline_mode=pl.Buffered(1))
        else:
            w_spec = lambda r, c: pl.BlockSpec((r, c), lambda b, t: (0, 0))
        return pl.pallas_call(
            kernel,
            out_shape=(
                jax.ShapeDtypeStruct((B, D, n_pad), perception_nchw.dtype),
                jax.ShapeDtypeStruct((B, MD, n_pad), ltm_nchw.dtype),
            ),
            grid_spec=pl.GridSpec(
                grid=grid,
                in_specs=[
                    tok_spec(D),            # perception tokens
                    tok_spec(MD),           # ltm tokens
                    w_spec(D, MD),          # wm_w
                    w_spec(D, 1),           # wm_b
                    w_spec(D, D),           # aw (wm half)
                    w_spec(D, D),           # aw (perception half)
                    w_spec(D, 1),           # a_b
                    w_spec(MD, D),          # uw
                    w_spec(MD, 1),          # u_b
                ],
                out_specs=(tok_spec(D), tok_spec(MD)),
            ),
            compiler_params=pltpu.CompilerParams(
                dimension_semantics=("parallel", "parallel"),
                vmem_limit_bytes=vmem_limit),
            cost_estimate=cost,
        )(p, l, params["wm_w"], params["wm_b"], aw_wm, aw_p,
          params["a_b"], params["uw"], params["u_b"])

    try:
        attn, ltm_new = _call(True)
    except Exception:
        # Older JAX without BlockSpec pipeline_mode support: default buffering.
        attn, ltm_new = _call(False)

    if n_pad != N:
        attn = attn[:, :, :N]
        ltm_new = ltm_new[:, :, :N]

    # (B, C, tokens) -> NCHW: pure reshape again.
    return attn.reshape(B, D, H, W), ltm_new.reshape(B, MD, H, W)


def _reference(perception_nchw, ltm_nchw, params, matmul_dtype=jnp.float32):
    """Pure-JAX reference (same math, channel-major)."""
    B, D, H, W = perception_nchw.shape
    MD = ltm_nchw.shape[1]
    md = matmul_dtype
    p = perception_nchw.reshape(B, D, -1).astype(jnp.float32)
    l = ltm_nchw.reshape(B, MD, -1).astype(jnp.float32)

    def mm(w, x):
        return jnp.einsum("oi,bit->bot", w.astype(md), x.astype(md),
                          preferred_element_type=jnp.float32)

    wm = mm(params["wm_w"], l) + params["wm_b"]
    g = _gelu(jnp.concatenate([wm, p], axis=1))
    attn = mm(params["aw"], g) + params["a_b"]
    ltm_new = _gelu(mm(params["uw"], attn) + params["u_b"] + l)
    return attn.reshape(B, D, H, W), ltm_new.reshape(B, MD, H, W)


def make_params(key, dim, memory_dim):
    """Deterministic synthetic parameters in (out_ch, in_ch) channel-major form.

    Torch shapes: wm (dim, memory_dim, 1, 1), attn (dim, 2*dim, 1, 1) with
    input-channel order [wm | perception], update_ltm (memory_dim, dim, 1, 1),
    biases (out,).  Here: 2-D (out, in) weights and (out, 1) bias columns.
    """
    ks = jax.random.split(key, 6)
    wm_w = jax.random.normal(ks[0], (dim, memory_dim), jnp.float32) * (1.0 / math.sqrt(memory_dim))
    wm_b = jax.random.normal(ks[1], (dim, 1), jnp.float32) * 0.02
    aw = jax.random.normal(ks[2], (dim, 2 * dim), jnp.float32) * (1.0 / math.sqrt(2 * dim))
    a_b = jax.random.normal(ks[3], (dim, 1), jnp.float32) * 0.02
    uw = jax.random.normal(ks[4], (memory_dim, dim), jnp.float32) * (1.0 / math.sqrt(dim))
    u_b = jax.random.normal(ks[5], (memory_dim, 1), jnp.float32) * 0.02
    return {"wm_w": wm_w, "wm_b": wm_b, "aw": aw, "a_b": a_b, "uw": uw, "u_b": u_b}


if __name__ == "__main__":
    # Small shapes: batch=2, dim=32, memory_dim=16, spatial 16x16 (256 tokens).
    B, D, MD, H, W = 2, 32, 16, 16, 16
    key = jax.random.PRNGKey(0)
    kp, kl, kw = jax.random.split(key, 3)

    perception = jax.random.normal(kp, (B, D, H, W), jnp.float32)   # NCHW like torch
    ltm = jax.random.normal(kl, (B, MD, H, W), jnp.float32)         # NCHW like torch
    params = make_params(kw, D, MD)

    # 1) Exact-parity path (f32 matmuls) vs pure-JAX reference.
    attn32, ltm32 = memory_forward(perception, ltm, params, matmul_dtype=jnp.float32)
    jax.block_until_ready((attn32, ltm32))
    attn_ref, ltm_ref = _reference(perception, ltm, params)
    np.testing.assert_allclose(np.asarray(attn32), np.asarray(attn_ref), rtol=1e-5, atol=1e-5)
    np.testing.assert_allclose(np.asarray(ltm32), np.asarray(ltm_ref), rtol=1e-5, atol=1e-5)

    # 2) Default bandwidth/MXU-optimal path (bf16 operands, f32 accumulation)
    #    vs a reference with the same bf16 operand casts.
    attn_bf, ltm_bf = memory_forward(perception, ltm, params)
    jax.block_until_ready((attn_bf, ltm_bf))
    attn_ref_bf, ltm_ref_bf = _reference(perception, ltm, params,
                                         matmul_dtype=jnp.bfloat16)
    np.testing.assert_allclose(np.asarray(attn_bf), np.asarray(attn_ref_bf), rtol=1e-2, atol=1e-2)
    np.testing.assert_allclose(np.asarray(ltm_bf), np.asarray(ltm_ref_bf), rtol=1e-2, atol=1e-2)

    # 3) Non-128-divisible token count exercises the padding path (10x10 = 100).
    Hs, Ws = 10, 10
    p_s = jax.random.normal(kp, (B, D, Hs, Ws), jnp.float32)
    l_s = jax.random.normal(kl, (B, MD, Hs, Ws), jnp.float32)
    a_s, n_s = memory_forward(p_s, l_s, params, matmul_dtype=jnp.float32)
    jax.block_until_ready((a_s, n_s))
    a_sr, n_sr = _reference(p_s, l_s, params)
    np.testing.assert_allclose(np.asarray(a_s), np.asarray(a_sr), rtol=1e-5, atol=1e-5)
    np.testing.assert_allclose(np.asarray(n_s), np.asarray(n_sr), rtol=1e-5, atol=1e-5)

    print("KERNEL_OK")
</pallas_src>

<mosaic_0001>
module attributes {stable_mosaic.version = 11 : i64} {
  func.func @memory_kernel(%arg0: i32, %arg1: i32, %arg2: memref<1x32x256xf32, #tpu.memory_space<vmem>>, %arg3: memref<1x16x256xf32, #tpu.memory_space<vmem>>, %arg4: memref<32x16xf32, #tpu.memory_space<vmem>>, %arg5: memref<32x1xf32, #tpu.memory_space<vmem>>, %arg6: memref<32x32xf32, #tpu.memory_space<vmem>>, %arg7: memref<32x32xf32, #tpu.memory_space<vmem>>, %arg8: memref<32x1xf32, #tpu.memory_space<vmem>>, %arg9: memref<16x32xf32, #tpu.memory_space<vmem>>, %arg10: memref<16x1xf32, #tpu.memory_space<vmem>>, %arg11: memref<1x32x256xf32, #tpu.memory_space<vmem>>, %arg12: memref<1x16x256xf32, #tpu.memory_space<vmem>>) attributes {dimension_semantics = [#tpu.dimension_semantics<parallel>, #tpu.dimension_semantics<parallel>], iteration_bounds = array<i64: 2, 1>, scalar_prefetch = 0 : i64, scratch_operands = 0 : i64, tpu.core_type = #tpu.core_type<tc>, window_params = [{transform_indices = @transform_0, window_bounds = array<i64: 1, 32, 256>}, {transform_indices = @transform_1, window_bounds = array<i64: 1, 16, 256>}, {pipeline_mode = #tpu.pipeline_mode<synchronous>, transform_indices = @transform_2, window_bounds = array<i64: 32, 16>}, {pipeline_mode = #tpu.pipeline_mode<synchronous>, transform_indices = @transform_3, window_bounds = array<i64: 32, 1>}, {pipeline_mode = #tpu.pipeline_mode<synchronous>, transform_indices = @transform_4, window_bounds = array<i64: 32, 32>}, {pipeline_mode = #tpu.pipeline_mode<synchronous>, transform_indices = @transform_5, window_bounds = array<i64: 32, 32>}, {pipeline_mode = #tpu.pipeline_mode<synchronous>, transform_indices = @transform_6, window_bounds = array<i64: 32, 1>}, {pipeline_mode = #tpu.pipeline_mode<synchronous>, transform_indices = @transform_7, window_bounds = array<i64: 16, 32>}, {pipeline_mode = #tpu.pipeline_mode<synchronous>, transform_indices = @transform_8, window_bounds = array<i64: 16, 1>}, {transform_indices = @transform_9, window_bounds = array<i64: 1, 32, 256>}, {transform_indices = @transform_10, window_bounds = array<i64: 1, 16, 256>}]} {
    %c0 = arith.constant 0 : index
    %c0_0 = arith.constant 0 : index
    %c0_1 = arith.constant 0 : index
    %0 = vector.load %arg3[%c0, %c0_0, %c0_1] : memref<1x16x256xf32, #tpu.memory_space<vmem>>, vector<1x16x256xf32>
    %1 = vector.shape_cast %0 : vector<1x16x256xf32> to vector<16x256xf32>
    %c0_2 = arith.constant 0 : index
    %c0_3 = arith.constant 0 : index
    %2 = vector.load %arg4[%c0_2, %c0_3] : memref<32x16xf32, #tpu.memory_space<vmem>>, vector<32x16xf32>
    %c0_4 = arith.constant 0 : index
    %c0_5 = arith.constant 0 : index
    %c0_6 = arith.constant 0 : index
    %3 = vector.load %arg3[%c0_4, %c0_5, %c0_6] : memref<1x16x256xf32, #tpu.memory_space<vmem>>, vector<1x16x256xf32>
    %4 = vector.shape_cast %3 : vector<1x16x256xf32> to vector<16x256xf32>
    %cst = arith.constant dense<0.000000e+00> : vector<32x256xf32>
    %5 = tpu.matmul %2, %4, %cst {dimension_numbers = #tpu.dot_dimension_numbers<[1], [0], [0], [1], [0, 0, 1, 1], [], []>} : vector<32x16xf32>, vector<16x256xf32>, vector<32x256xf32> -> vector<32x256xf32>
    %c0_7 = arith.constant 0 : index
    %c0_8 = arith.constant 0 : index
    %6 = vector.load %arg5[%c0_7, %c0_8] : memref<32x1xf32, #tpu.memory_space<vmem>>, vector<32x1xf32>
    %7 = vector.broadcast %6 : vector<32x1xf32> to vector<32x256xf32>
    %8 = arith.addf %5, %7 : vector<32x256xf32>
    %cst_9 = arith.constant 5.000000e-01 : f32
    %9 = vector.broadcast %cst_9 : f32 to vector<32x256xf32>
    %10 = arith.mulf %9, %8 : vector<32x256xf32>
    %cst_10 = arith.constant 0.707106769 : f32
    %11 = vector.broadcast %cst_10 : f32 to vector<32x256xf32>
    %12 = arith.mulf %8, %11 : vector<32x256xf32>
    %13 = math.erf %12 : vector<32x256xf32>
    %cst_11 = arith.constant 1.000000e+00 : f32
    %14 = vector.broadcast %cst_11 : f32 to vector<32x256xf32>
    %15 = arith.addf %14, %13 : vector<32x256xf32>
    %16 = arith.mulf %10, %15 : vector<32x256xf32>
    %c0_12 = arith.constant 0 : index
    %c0_13 = arith.constant 0 : index
    %c0_14 = arith.constant 0 : index
    %17 = vector.load %arg2[%c0_12, %c0_13, %c0_14] : memref<1x32x256xf32, #tpu.memory_space<vmem>>, vector<1x32x256xf32>
    %18 = vector.shape_cast %17 : vector<1x32x256xf32> to vector<32x256xf32>
    %cst_15 = arith.constant 5.000000e-01 : f32
    %19 = vector.broadcast %cst_15 : f32 to vector<32x256xf32>
    %20 = arith.mulf %19, %18 : vector<32x256xf32>
    %cst_16 = arith.constant 0.707106769 : f32
    %21 = vector.broadcast %cst_16 : f32 to vector<32x256xf32>
    %22 = arith.mulf %18, %21 : vector<32x256xf32>
    %23 = math.erf %22 : vector<32x256xf32>
    %cst_17 = arith.constant 1.000000e+00 : f32
    %24 = vector.broadcast %cst_17 : f32 to vector<32x256xf32>
    %25 = arith.addf %24, %23 : vector<32x256xf32>
    %26 = arith.mulf %20, %25 : vector<32x256xf32>
    %c0_18 = arith.constant 0 : index
    %c0_19 = arith.constant 0 : index
    %27 = vector.load %arg6[%c0_18, %c0_19] : memref<32x32xf32, #tpu.memory_space<vmem>>, vector<32x32xf32>
    %cst_20 = arith.constant dense<0.000000e+00> : vector<32x256xf32>
    %28 = tpu.matmul %27, %16, %cst_20 {dimension_numbers = #tpu.dot_dimension_numbers<[1], [0], [0], [1], [0, 0, 1, 1], [], []>} : vector<32x32xf32>, vector<32x256xf32>, vector<32x256xf32> -> vector<32x256xf32>
    %c0_21 = arith.constant 0 : index
    %c0_22 = arith.constant 0 : index
    %29 = vector.load %arg7[%c0_21, %c0_22] : memref<32x32xf32, #tpu.memory_space<vmem>>, vector<32x32xf32>
    %cst_23 = arith.constant dense<0.000000e+00> : vector<32x256xf32>
    %30 = tpu.matmul %29, %26, %cst_23 {dimension_numbers = #tpu.dot_dimension_numbers<[1], [0], [0], [1], [0, 0, 1, 1], [], []>} : vector<32x32xf32>, vector<32x256xf32>, vector<32x256xf32> -> vector<32x256xf32>
    %31 = arith.addf %28, %30 : vector<32x256xf32>
    %c0_24 = arith.constant 0 : index
    %c0_25 = arith.constant 0 : index
    %32 = vector.load %arg8[%c0_24, %c0_25] : memref<32x1xf32, #tpu.memory_space<vmem>>, vector<32x1xf32>
    %33 = vector.broadcast %32 : vector<32x1xf32> to vector<32x256xf32>
    %34 = arith.addf %31, %33 : vector<32x256xf32>
    %c0_26 = arith.constant 0 : index
    %c0_27 = arith.constant 0 : index
    %35 = vector.load %arg9[%c0_26, %c0_27] : memref<16x32xf32, #tpu.memory_space<vmem>>, vector<16x32xf32>
    %cst_28 = arith.constant dense<0.000000e+00> : vector<16x256xf32>
    %36 = tpu.matmul %35, %34, %cst_28 {dimension_numbers = #tpu.dot_dimension_numbers<[1], [0], [0], [1], [0, 0, 1, 1], [], []>} : vector<16x32xf32>, vector<32x256xf32>, vector<16x256xf32> -> vector<16x256xf32>
    %c0_29 = arith.constant 0 : index
    %c0_30 = arith.constant 0 : index
    %37 = vector.load %arg10[%c0_29, %c0_30] : memref<16x1xf32, #tpu.memory_space<vmem>>, vector<16x1xf32>
    %38 = vector.broadcast %37 : vector<16x1xf32> to vector<16x256xf32>
    %39 = arith.addf %36, %38 : vector<16x256xf32>
    %40 = arith.addf %39, %1 : vector<16x256xf32>
    %cst_31 = arith.constant 5.000000e-01 : f32
    %41 = vector.broadcast %cst_31 : f32 to vector<16x256xf32>
    %42 = arith.mulf %41, %40 : vector<16x256xf32>
    %cst_32 = arith.constant 0.707106769 : f32
    %43 = vector.broadcast %cst_32 : f32 to vector<16x256xf32>
    %44 = arith.mulf %40, %43 : vector<16x256xf32>
    %45 = math.erf %44 : vector<16x256xf32>
    %cst_33 = arith.constant 1.000000e+00 : f32
    %46 = vector.broadcast %cst_33 : f32 to vector<16x256xf32>
    %47 = arith.addf %46, %45 : vector<16x256xf32>
    %48 = arith.mulf %42, %47 : vector<16x256xf32>
    %c0_34 = arith.constant 0 : index
    %c0_35 = arith.constant 0 : index
    %c0_36 = arith.constant 0 : index
    %49 = vector.load %arg11[%c0_34, %c0_35, %c0_36] : memref<1x32x256xf32, #tpu.memory_space<vmem>>, vector<1x32x256xf32>
    %50 = vector.shape_cast %49 : vector<1x32x256xf32> to vector<32x256xf32>
    %51 = vector.shape_cast %34 : vector<32x256xf32> to vector<1x32x256xf32>
    tpu.vector_store %arg11[%c0_34, %c0_35, %c0_36], %51 {strides = array<i32>} : memref<1x32x256xf32, #tpu.memory_space<vmem>>, vector<1x32x256xf32>,
    %c0_37 = arith.constant 0 : index
    %c0_38 = arith.constant 0 : index
    %c0_39 = arith.constant 0 : index
    %52 = vector.load %arg12[%c0_37, %c0_38, %c0_39] : memref<1x16x256xf32, #tpu.memory_space<vmem>>, vector<1x16x256xf32>
    %53 = vector.shape_cast %52 : vector<1x16x256xf32> to vector<16x256xf32>
    %54 = vector.shape_cast %48 : vector<16x256xf32> to vector<1x16x256xf32>
    tpu.vector_store %arg12[%c0_37, %c0_38, %c0_39], %54 {strides = array<i32>} : memref<1x16x256xf32, #tpu.memory_space<vmem>>, vector<1x16x256xf32>,
    return
  }
  func.func @transform_0(%arg0: i32, %arg1: i32) -> (i32, i32, i32) {
    %c0_i32 = arith.constant 0 : i32
    %c0_i32_0 = arith.constant 0 : i32
    return %arg0, %c0_i32, %arg1 : i32, i32, i32
  }
  func.func @transform_1(%arg0: i32, %arg1: i32) -> (i32, i32, i32) {
    %c0_i32 = arith.constant 0 : i32
    %c0_i32_0 = arith.constant 0 : i32
    return %arg0, %c0_i32, %arg1 : i32, i32, i32
  }
  func.func @transform_2(%arg0: i32, %arg1: i32) -> (i32, i32) {
    %c0_i32 = arith.constant 0 : i32
    %c0_i32_0 = arith.constant 0 : i32
    %c0_i32_1 = arith.constant 0 : i32
    return %c0_i32, %c0_i32_0 : i32, i32
  }
  func.func @transform_3(%arg0: i32, %arg1: i32) -> (i32, i32) {
    %c0_i32 = arith.constant 0 : i32
    %c0_i32_0 = arith.constant 0 : i32
    %c0_i32_1 = arith.constant 0 : i32
    return %c0_i32, %c0_i32_0 : i32, i32
  }
  func.func @transform_4(%arg0: i32, %arg1: i32) -> (i32, i32) {
    %c0_i32 = arith.constant 0 : i32
    %c0_i32_0 = arith.constant 0 : i32
    %c0_i32_1 = arith.constant 0 : i32
    return %c0_i32, %c0_i32_0 : i32, i32
  }
  func.func @transform_5(%arg0: i32, %arg1: i32) -> (i32, i32) {
    %c0_i32 = arith.constant 0 : i32
    %c0_i32_0 = arith.constant 0 : i32
    %c0_i32_1 = arith.constant 0 : i32
    return %c0_i32, %c0_i32_0 : i32, i32
  }
  func.func @transform_6(%arg0: i32, %arg1: i32) -> (i32, i32) {
    %c0_i32 = arith.constant 0 : i32
    %c0_i32_0 = arith.constant 0 : i32
    %c0_i32_1 = arith.constant 0 : i32
    return %c0_i32, %c0_i32_0 : i32, i32
  }
  func.func @transform_7(%arg0: i32, %arg1: i32) -> (i32, i32) {
    %c0_i32 = arith.constant 0 : i32
    %c0_i32_0 = arith.constant 0 : i32
    %c0_i32_1 = arith.constant 0 : i32
    return %c0_i32, %c0_i32_0 : i32, i32
  }
  func.func @transform_8(%arg0: i32, %arg1: i32) -> (i32, i32) {
    %c0_i32 = arith.constant 0 : i32
    %c0_i32_0 = arith.constant 0 : i32
    %c0_i32_1 = arith.constant 0 : i32
    return %c0_i32, %c0_i32_0 : i32, i32
  }
  func.func @transform_9(%arg0: i32, %arg1: i32) -> (i32, i32, i32) {
    %c0_i32 = arith.constant 0 : i32
    %c0_i32_0 = arith.constant 0 : i32
    return %arg0, %c0_i32, %arg1 : i32, i32, i32
  }
  func.func @transform_10(%arg0: i32, %arg1: i32) -> (i32, i32, i32) {
    %c0_i32 = arith.constant 0 : i32
    %c0_i32_0 = arith.constant 0 : i32
    return %arg0, %c0_i32, %arg1 : i32, i32, i32
  }
}

module attributes {stable_mosaic.version = 11 : i64} {
  func.func @memory_kernel(%arg0: i32, %arg1: i32, %arg2: memref<1x32x256xf32, #tpu.memory_space<vmem>>, %arg3: memref<1x16x256xf32, #tpu.memory_space<vmem>>, %arg4: memref<32x16xf32, #tpu.memory_space<vmem>>, %arg5: memref<32x1xf32, #tpu.memory_space<vmem>>, %arg6: memref<32x32xf32, #tpu.memory_space<vmem>>, %arg7: memref<32x32xf32, #tpu.memory_space<vmem>>, %arg8: memref<32x1xf32, #tpu.memory_space<vmem>>, %arg9: memref<16x32xf32, #tpu.memory_space<vmem>>, %arg10: memref<16x1xf32, #tpu.memory_space<vmem>>, %arg11: memref<1x32x256xf32, #tpu.memory_space<vmem>>, %arg12: memref<1x16x256xf32, #tpu.memory_space<vmem>>) attributes {dimension_semantics = [#tpu.dimension_semantics<parallel>, #tpu.dimension_semantics<parallel>], iteration_bounds = array<i64: 2, 1>, scalar_prefetch = 0 : i64, scratch_operands = 0 : i64, tpu.core_type = #tpu.core_type<tc>, window_params = [{transform_indices = @transform_0, window_bounds = array<i64: 1, 32, 256>}, {transform_indices = @transform_1, window_bounds = array<i64: 1, 16, 256>}, {pipeline_mode = #tpu.pipeline_mode<synchronous>, transform_indices = @transform_2, window_bounds = array<i64: 32, 16>}, {pipeline_mode = #tpu.pipeline_mode<synchronous>, transform_indices = @transform_3, window_bounds = array<i64: 32, 1>}, {pipeline_mode = #tpu.pipeline_mode<synchronous>, transform_indices = @transform_4, window_bounds = array<i64: 32, 32>}, {pipeline_mode = #tpu.pipeline_mode<synchronous>, transform_indices = @transform_5, window_bounds = array<i64: 32, 32>}, {pipeline_mode = #tpu.pipeline_mode<synchronous>, transform_indices = @transform_6, window_bounds = array<i64: 32, 1>}, {pipeline_mode = #tpu.pipeline_mode<synchronous>, transform_indices = @transform_7, window_bounds = array<i64: 16, 32>}, {pipeline_mode = #tpu.pipeline_mode<synchronous>, transform_indices = @transform_8, window_bounds = array<i64: 16, 1>}, {transform_indices = @transform_9, window_bounds = array<i64: 1, 32, 256>}, {transform_indices = @transform_10, window_bounds = array<i64: 1, 16, 256>}]} {
    %c0 = arith.constant 0 : index
    %c0_0 = arith.constant 0 : index
    %c0_1 = arith.constant 0 : index
    %0 = vector.load %arg3[%c0, %c0_0, %c0_1] : memref<1x16x256xf32, #tpu.memory_space<vmem>>, vector<1x16x256xf32>
    %1 = vector.shape_cast %0 : vector<1x16x256xf32> to vector<16x256xf32>
    %c0_2 = arith.constant 0 : index
    %c0_3 = arith.constant 0 : index
    %2 = vector.load %arg4[%c0_2, %c0_3] : memref<32x16xf32, #tpu.memory_space<vmem>>, vector<32x16xf32>
    %c0_4 = arith.constant 0 : index
    %c0_5 = arith.constant 0 : index
    %c0_6 = arith.constant 0 : index
    %3 = vector.load %arg3[%c0_4, %c0_5, %c0_6] : memref<1x16x256xf32, #tpu.memory_space<vmem>>, vector<1x16x256xf32>
    %4 = vector.shape_cast %3 : vector<1x16x256xf32> to vector<16x256xf32>
    %cst = arith.constant dense<0.000000e+00> : vector<32x256xf32>
    %5 = tpu.matmul %2, %4, %cst {dimension_numbers = #tpu.dot_dimension_numbers<[1], [0], [0], [1], [0, 0, 1, 1], [], []>} : vector<32x16xf32>, vector<16x256xf32>, vector<32x256xf32> -> vector<32x256xf32>
    %c0_7 = arith.constant 0 : index
    %c0_8 = arith.constant 0 : index
    %6 = vector.load %arg5[%c0_7, %c0_8] : memref<32x1xf32, #tpu.memory_space<vmem>>, vector<32x1xf32>
    %7 = vector.broadcast %6 : vector<32x1xf32> to vector<32x256xf32>
    %8 = arith.addf %5, %7 : vector<32x256xf32>
    %cst_9 = arith.constant 5.000000e-01 : f32
    %9 = vector.broadcast %cst_9 : f32 to vector<32x256xf32>
    %10 = arith.mulf %9, %8 : vector<32x256xf32>
    %cst_10 = arith.constant 0.707106769 : f32
    %11 = vector.broadcast %cst_10 : f32 to vector<32x256xf32>
    %12 = arith.mulf %8, %11 : vector<32x256xf32>
    %13 = math.erf %12 : vector<32x256xf32>
    %cst_11 = arith.constant 1.000000e+00 : f32
    %14 = vector.broadcast %cst_11 : f32 to vector<32x256xf32>
    %15 = arith.addf %14, %13 : vector<32x256xf32>
    %16 = arith.mulf %10, %15 : vector<32x256xf32>
    %c0_12 = arith.constant 0 : index
    %c0_13 = arith.constant 0 : index
    %c0_14 = arith.constant 0 : index
    %17 = vector.load %arg2[%c0_12, %c0_13, %c0_14] : memref<1x32x256xf32, #tpu.memory_space<vmem>>, vector<1x32x256xf32>
    %18 = vector.shape_cast %17 : vector<1x32x256xf32> to vector<32x256xf32>
    %cst_15 = arith.constant 5.000000e-01 : f32
    %19 = vector.broadcast %cst_15 : f32 to vector<32x256xf32>
    %20 = arith.mulf %19, %18 : vector<32x256xf32>
    %cst_16 = arith.constant 0.707106769 : f32
    %21 = vector.broadcast %cst_16 : f32 to vector<32x256xf32>
    %22 = arith.mulf %18, %21 : vector<32x256xf32>
    %23 = math.erf %22 : vector<32x256xf32>
    %cst_17 = arith.constant 1.000000e+00 : f32
    %24 = vector.broadcast %cst_17 : f32 to vector<32x256xf32>
    %25 = arith.addf %24, %23 : vector<32x256xf32>
    %26 = arith.mulf %20, %25 : vector<32x256xf32>
    %c0_18 = arith.constant 0 : index
    %c0_19 = arith.constant 0 : index
    %27 = vector.load %arg6[%c0_18, %c0_19] : memref<32x32xf32, #tpu.memory_space<vmem>>, vector<32x32xf32>
    %cst_20 = arith.constant dense<0.000000e+00> : vector<32x256xf32>
    %28 = tpu.matmul %27, %16, %cst_20 {dimension_numbers = #tpu.dot_dimension_numbers<[1], [0], [0], [1], [0, 0, 1, 1], [], []>} : vector<32x32xf32>, vector<32x256xf32>, vector<32x256xf32> -> vector<32x256xf32>
    %c0_21 = arith.constant 0 : index
    %c0_22 = arith.constant 0 : index
    %29 = vector.load %arg7[%c0_21, %c0_22] : memref<32x32xf32, #tpu.memory_space<vmem>>, vector<32x32xf32>
    %cst_23 = arith.constant dense<0.000000e+00> : vector<32x256xf32>
    %30 = tpu.matmul %29, %26, %cst_23 {dimension_numbers = #tpu.dot_dimension_numbers<[1], [0], [0], [1], [0, 0, 1, 1], [], []>} : vector<32x32xf32>, vector<32x256xf32>, vector<32x256xf32> -> vector<32x256xf32>
    %31 = arith.addf %28, %30 : vector<32x256xf32>
    %c0_24 = arith.constant 0 : index
    %c0_25 = arith.constant 0 : index
    %32 = vector.load %arg8[%c0_24, %c0_25] : memref<32x1xf32, #tpu.memory_space<vmem>>, vector<32x1xf32>
    %33 = vector.broadcast %32 : vector<32x1xf32> to vector<32x256xf32>
    %34 = arith.addf %31, %33 : vector<32x256xf32>
    %c0_26 = arith.constant 0 : index
    %c0_27 = arith.constant 0 : index
    %35 = vector.load %arg9[%c0_26, %c0_27] : memref<16x32xf32, #tpu.memory_space<vmem>>, vector<16x32xf32>
    %cst_28 = arith.constant dense<0.000000e+00> : vector<16x256xf32>
    %36 = tpu.matmul %35, %34, %cst_28 {dimension_numbers = #tpu.dot_dimension_numbers<[1], [0], [0], [1], [0, 0, 1, 1], [], []>} : vector<16x32xf32>, vector<32x256xf32>, vector<16x256xf32> -> vector<16x256xf32>
    %c0_29 = arith.constant 0 : index
    %c0_30 = arith.constant 0 : index
    %37 = vector.load %arg10[%c0_29, %c0_30] : memref<16x1xf32, #tpu.memory_space<vmem>>, vector<16x1xf32>
    %38 = vector.broadcast %37 : vector<16x1xf32> to vector<16x256xf32>
    %39 = arith.addf %36, %38 : vector<16x256xf32>
    %40 = arith.addf %39, %1 : vector<16x256xf32>
    %cst_31 = arith.constant 5.000000e-01 : f32
    %41 = vector.broadcast %cst_31 : f32 to vector<16x256xf32>
    %42 = arith.mulf %41, %40 : vector<16x256xf32>
    %cst_32 = arith.constant 0.707106769 : f32
    %43 = vector.broadcast %cst_32 : f32 to vector<16x256xf32>
    %44 = arith.mulf %40, %43 : vector<16x256xf32>
    %45 = math.erf %44 : vector<16x256xf32>
    %cst_33 = arith.constant 1.000000e+00 : f32
    %46 = vector.broadcast %cst_33 : f32 to vector<16x256xf32>
    %47 = arith.addf %46, %45 : vector<16x256xf32>
    %48 = arith.mulf %42, %47 : vector<16x256xf32>
    %c0_34 = arith.constant 0 : index
    %c0_35 = arith.constant 0 : index
    %c0_36 = arith.constant 0 : index
    %49 = vector.load %arg11[%c0_34, %c0_35, %c0_36] : memref<1x32x256xf32, #tpu.memory_space<vmem>>, vector<1x32x256xf32>
    %50 = vector.shape_cast %49 : vector<1x32x256xf32> to vector<32x256xf32>
    %51 = vector.shape_cast %34 : vector<32x256xf32> to vector<1x32x256xf32>
    tpu.vector_store %arg11[%c0_34, %c0_35, %c0_36], %51 {strides = array<i32>} : memref<1x32x256xf32, #tpu.memory_space<vmem>>, vector<1x32x256xf32>,
    %c0_37 = arith.constant 0 : index
    %c0_38 = arith.constant 0 : index
    %c0_39 = arith.constant 0 : index
    %52 = vector.load %arg12[%c0_37, %c0_38, %c0_39] : memref<1x16x256xf32, #tpu.memory_space<vmem>>, vector<1x16x256xf32>
    %53 = vector.shape_cast %52 : vector<1x16x256xf32> to vector<16x256xf32>
    %54 = vector.shape_cast %48 : vector<16x256xf32> to vector<1x16x256xf32>
    tpu.vector_store %arg12[%c0_37, %c0_38, %c0_39], %54 {strides = array<i32>} : memref<1x16x256xf32, #tpu.memory_space<vmem>>, vector<1x16x256xf32>,
    return
  }
  func.func @transform_0(%arg0: i32, %arg1: i32) -> (i32, i32, i32) {
    %c0_i32 = arith.constant 0 : i32
    %c0_i32_0 = arith.constant 0 : i32
    return %arg0, %c0_i32, %arg1 : i32, i32, i32
  }
  func.func @transform_1(%arg0: i32, %arg1: i32) -> (i32, i32, i32) {
    %c0_i32 = arith.constant 0 : i32
    %c0_i32_0 = arith.constant 0 : i32
    return %arg0, %c0_i32, %arg1 : i32, i32, i32
  }
  func.func @transform_2(%arg0: i32, %arg1: i32) -> (i32, i32) {
    %c0_i32 = arith.constant 0 : i32
    %c0_i32_0 = arith.constant 0 : i32
    %c0_i32_1 = arith.constant 0 : i32
    return %c0_i32, %c0_i32_0 : i32, i32
  }
  func.func @transform_3(%arg0: i32, %arg1: i32) -> (i32, i32) {
    %c0_i32 = arith.constant 0 : i32
    %c0_i32_0 = arith.constant 0 : i32
    %c0_i32_1 = arith.constant 0 : i32
    return %c0_i32, %c0_i32_0 : i32, i32
  }
  func.func @transform_4(%arg0: i32, %arg1: i32) -> (i32, i32) {
    %c0_i32 = arith.constant 0 : i32
    %c0_i32_0 = arith.constant 0 : i32
    %c0_i32_1 = arith.constant 0 : i32
    return %c0_i32, %c0_i32_0 : i32, i32
  }
  func.func @transform_5(%arg0: i32, %arg1: i32) -> (i32, i32) {
    %c0_i32 = arith.constant 0 : i32
    %c0_i32_0 = arith.constant 0 : i32
    %c0_i32_1 = arith.constant 0 : i32
    return %c0_i32, %c0_i32_0 : i32, i32
  }
  func.func @transform_6(%arg0: i32, %arg1: i32) -> (i32, i32) {
    %c0_i32 = arith.constant 0 : i32
    %c0_i32_0 = arith.constant 0 : i32
    %c0_i32_1 = arith.constant 0 : i32
    return %c0_i32, %c0_i32_0 : i32, i32
  }
  func.func @transform_7(%arg0: i32, %arg1: i32) -> (i32, i32) {
    %c0_i32 = arith.constant 0 : i32
    %c0_i32_0 = arith.constant 0 : i32
    %c0_i32_1 = arith.constant 0 : i32
    return %c0_i32, %c0_i32_0 : i32, i32
  }
  func.func @transform_8(%arg0: i32, %arg1: i32) -> (i32, i32) {
    %c0_i32 = arith.constant 0 : i32
    %c0_i32_0 = arith.constant 0 : i32
    %c0_i32_1 = arith.constant 0 : i32
    return %c0_i32, %c0_i32_0 : i32, i32
  }
  func.func @transform_9(%arg0: i32, %arg1: i32) -> (i32, i32, i32) {
    %c0_i32 = arith.constant 0 : i32
    %c0_i32_0 = arith.constant 0 : i32
    return %arg0, %c0_i32, %arg1 : i32, i32, i32
  }
  func.func @transform_10(%arg0: i32, %arg1: i32) -> (i32, i32, i32) {
    %c0_i32 = arith.constant 0 : i32
    %c0_i32_0 = arith.constant 0 : i32
    return %arg0, %c0_i32, %arg1 : i32, i32, i32
  }
}

</mosaic_0001>

<llo_original>
// kernel: tpu_custom_call.1
$region0: #{tpu_custom_call.1}
  #allocation0 [shape = 'u32[]', space=smem, size = 0x4, offset = 0x4, fixed_abs, tag = 'smem constant byte address 0x4 - core index']
  #allocation1 [shape = 'u32[144,128]{1,0:T(1,128)}', space=vmem, size = 0x12000, scoped, tag = 'internal scratch']
  %s0 = inlined_call_operand.vmem [shape: f32[2,32,256], index: 0, kind: input, shape index: {}]
  %s1 = inlined_call_operand.hbm [shape: f32[2,16,256], index: 1, kind: input, shape index: {}]
  %s2 = inlined_call_operand.vmem [shape: f32[32,16], index: 2, kind: input, shape index: {}]
  %s3 = inlined_call_operand.vmem [shape: f32[32,1], index: 3, kind: input, shape index: {}]
  %s4 = inlined_call_operand.hbm [shape: f32[32,32], index: 4, kind: input, shape index: {}]
  %s5 = inlined_call_operand.hbm [shape: f32[32,32], index: 5, kind: input, shape index: {}]
  %s6 = inlined_call_operand.vmem [shape: f32[32,1], index: 6, kind: input, shape index: {}]
  %s7 = inlined_call_operand.vmem [shape: f32[16,32], index: 7, kind: input, shape index: {}]
  %s8 = inlined_call_operand.vmem [shape: f32[16,1], index: 8, kind: input, shape index: {}]
  %s9 = inlined_call_operand.hbm [shape: f32[2,32,256], index: 9, kind: output, shape index: {0}]
  %s10 = inlined_call_operand.hbm [shape: f32[2,16,256], index: 10, kind: output, shape index: {1}]
  %11 = xla_tuple %s9, %s10
  %s12 = sld [smem:[#allocation0]]
  $region89: #{tpu_custom_call.1} parent=0
    _
  %s14 = ssub.s32 1, %s12
  %s15 = scalar_select 0, %s14, %s12
  $region1: #{tpu_custom_call.1} parent=0
    #allocation2 [shape = 'u8[32768]{0}', space=vmem, size = 0x8000, scoped, tag = 'input window, operand 1']
    #allocation3 [shape = 's32[2]{0}', space=sflag, size = 0x8, scoped, tag = 'scoped memory for tpu_custom_call.1']
    #allocation4 [shape = 's32[2]{0}', space=sflag, size = 0x8, scoped, tag = 'scoped memory for tpu_custom_call.1']
    #allocation5 [shape = 'u8[16384]{0}', space=vmem, size = 0x4000, scoped, tag = 'input window, operand 4, single buffered']
    #allocation6 [shape = 's32[1]{0}', space=sflag, size = 0x4, scoped, tag = 'scoped memory for tpu_custom_call.1']
    #allocation7 [shape = 'u8[16384]{0}', space=vmem, size = 0x4000, scoped, tag = 'input window, operand 5, single buffered']
    #allocation8 [shape = 'u8[65536]{0}', space=vmem, size = 0x10000, scoped, tag = 'output window, operand 0']
    #allocation9 [shape = 'u8[32768]{0}', space=vmem, size = 0x8000, scoped, tag = 'output window, operand 1']
    #allocation10 [shape = 's32[2]{0}', space=sflag, size = 0x8, scoped, tag = 'scoped memory for tpu_custom_call.1']
    %16 = vsyncpa [#allocation3], 0
    %s17 = scalar_lea.sflag [#allocation3], 1
    %18 = vsyncpa %s17, 0
    %19 = vsyncpa [#allocation6], 0
    %20 = vsyncpa [#allocation4], 0
    %s21 = scalar_lea.sflag [#allocation4], 1
    %22 = vsyncpa %s21, 0
    %23 = vsyncpa [#allocation10], 0
    %s24 = scalar_lea.sflag [#allocation10], 1
    %25 = vsyncpa %s24, 0
    loop: start=0, step=1, limit=4
    $region2: #{tpu_custom_call.1} parent=1 // loop_pre_header
      _
    $region3: #{tpu_custom_call.1} parent=1 // loop_header
      %s27 = sphi 0, %s31
      %p28 = scmp.ge.s32.totalorder %s27, 4
      %s34 = sphi 0, %s46
      %s35 = sphi 0, %s42
      %s36 = sphi 0, %s34
      %s37 = sphi 0, %s35
      %s38 = sphi 0, %s36
      %s39 = sphi 0, %s37
      %s51 = sphi 0, %s53
      %s54 = sphi 0, %s51
      %s55 = sphi 0, %s54
      %s71 = sphi 0, %s55
      %s79 = sphi 0, %s81
      %s82 = sphi 0, %s79
      %s83 = sphi 0, %s82
      %s99 = sphi 0, %s83
      %s103 = sphi 0, %s103
      %s105 = sphi 0, %s103
      %s106 = sphi 0, %s105
      %s120 = sphi 0, %s106
      %s124 = sphi 0, %s124
      %s126 = sphi 0, %s124
      %s127 = sphi 0, %s126
      %s141 = sphi 0, %s127
      %s145 = sphi 0, %s145
      %s147 = sphi 0, %s145
      %s148 = sphi 0, %s147
      %s162 = sphi 0, %s148
      %s166 = sphi 0, %s166
      %s168 = sphi 0, %s166
      %s169 = sphi 0, %s168
      %s183 = sphi 0, %s169
      %s187 = sphi 0, %s187
      %s189 = sphi 0, %s187
      %s190 = sphi 0, %s189
      %s204 = sphi 0, %s190
      %s208 = sphi 0, %s208
      %s210 = sphi 0, %s208
      %s211 = sphi 0, %s210
      %s225 = sphi 0, %s211
      %s229 = sphi 0, %s229
      %s231 = sphi 0, %s229
      %s232 = sphi 0, %s231
      %s246 = sphi 0, %s232
      %s254 = sphi 0, %s256
      %s257 = sphi 0, %s254
      %s258 = sphi 0, %s257
      %s274 = sphi 0, %s258
      %s282 = sphi 0, %s284
      %s285 = sphi 0, %s282
      %s286 = sphi 0, %s285
      %s302 = sphi 0, %s286
    $region4: #{tpu_custom_call.1} parent=1 // loop_header_branch
      %30 = sbr.rel (%p28) target = $region8
    $region5: #{tpu_custom_call.1} parent=1 // loop_body
      %s32 = ssub.s32 %s27, 1
      %s33 = ssub.s32 %s27, 2
      %s40 = sadd.s32 1, %s35
      %p41 = scmp.ge.s32.totalorder %s40, 1
      %s42 = scalar_select %p41, 0, %s40
      %s43 = sadd.s32 1, %s34
      %s44 = scalar_select %p41, %s43, %s34
      %p45 = scmp.ge.s32.totalorder %s44, 2
      %s46 = scalar_select %p45, 0, %s44
      %s47 = ssub.s32 %s34, %s46
      %s48 = ssub.s32 %s35, %s42
      %s49 = sor.u32 %s47, %s48
      %p50 = scmp.eq.s32.totalorder %s49, 0
      %s52 = sadd.s32 %s51, 1
      %s53 = scalar_select %p50, %s51, %s52
      %p56 = pneg %p50
      %p57 = scmp.eq.s32.totalorder %s27, 1
      %p58 = por %p56, %p57
      %p59 = scmp.ne.s32.totalorder %s51, %s54
      %p60 = scmp.eq.s32.totalorder %s27, 0
      %p61 = por %p59, %p60
      %p62 = scmp.ne.s32.totalorder %s51, %s54
      %p63 = scmp.eq.s32.totalorder %s32, 1
      %p64 = por %p62, %p63
      %p65 = scmp.ne.s32.totalorder %s54, %s55
      %p66 = scmp.eq.s32.totalorder %s32, 0
      %p67 = por %p65, %p66
      %p68 = scmp.ne.s32.totalorder %s54, %s55
      %p69 = scmp.eq.s32.totalorder %s33, 1
      %p70 = por %p68, %p69
      %p72 = scmp.ne.s32.totalorder %s55, %s71
      %p73 = scmp.eq.s32.totalorder %s33, 0
      %p74 = por %p72, %p73
      %s75 = ssub.s32 %s34, %s46
      %s76 = ssub.s32 %s35, %s42
      %s77 = sor.u32 %s75, %s76
      %p78 = scmp.eq.s32.totalorder %s77, 0
      %s80 = sadd.s32 %s79, 1
      %s81 = scalar_select %p78, %s79, %s80
      %p84 = pneg %p78
      %p85 = scmp.eq.s32.totalorder %s27, 1
      %p86 = por %p84, %p85
      %p87 = scmp.ne.s32.totalorder %s79, %s82
      %p88 = scmp.eq.s32.totalorder %s27, 0
      %p89 = por %p87, %p88
      %p90 = scmp.ne.s32.totalorder %s79, %s82
      %p91 = scmp.eq.s32.totalorder %s32, 1
      %p92 = por %p90, %p91
      %p93 = scmp.ne.s32.totalorder %s82, %s83
      %p94 = scmp.eq.s32.totalorder %s32, 0
      %p95 = por %p93, %p94
      %p96 = scmp.ne.s32.totalorder %s82, %s83
      %p97 = scmp.eq.s32.totalorder %s33, 1
      %p98 = por %p96, %p97
      %p100 = scmp.ne.s32.totalorder %s83, %s99
      %p101 = scmp.eq.s32.totalorder %s33, 0
      %p102 = por %p100, %p101
      %s104 = sadd.s32 %s103, 1
      %p107 = scmp.eq.s32.totalorder %s27, 1
      %p108 = scmp.ne.s32.totalorder %s103, %s105
      %p109 = scmp.eq.s32.totalorder %s27, 0
      %p110 = por %p108, %p109
      %p111 = scmp.ne.s32.totalorder %s103, %s105
      %p112 = scmp.eq.s32.totalorder %s32, 1
      %p113 = por %p111, %p112
      %p114 = scmp.ne.s32.totalorder %s105, %s106
      %p115 = scmp.eq.s32.totalorder %s32, 0
      %p116 = por %p114, %p115
      %p117 = scmp.ne.s32.totalorder %s105, %s106
      %p118 = scmp.eq.s32.totalorder %s33, 1
      %p119 = por %p117, %p118
      %p121 = scmp.ne.s32.totalorder %s106, %s120
      %p122 = scmp.eq.s32.totalorder %s33, 0
      %p123 = por %p121, %p122
      %s125 = sadd.s32 %s124, 1
      %p128 = scmp.eq.s32.totalorder %s27, 1
      %p129 = scmp.ne.s32.totalorder %s124, %s126
      %p130 = scmp.eq.s32.totalorder %s27, 0
      %p131 = por %p129, %p130
      %p132 = scmp.ne.s32.totalorder %s124, %s126
      %p133 = scmp.eq.s32.totalorder %s32, 1
      %p134 = por %p132, %p133
      %p135 = scmp.ne.s32.totalorder %s126, %s127
      %p136 = scmp.eq.s32.totalorder %s32, 0
      %p137 = por %p135, %p136
      %p138 = scmp.ne.s32.totalorder %s126, %s127
      %p139 = scmp.eq.s32.totalorder %s33, 1
      %p140 = por %p138, %p139
      %p142 = scmp.ne.s32.totalorder %s127, %s141
      %p143 = scmp.eq.s32.totalorder %s33, 0
      %p144 = por %p142, %p143
      %s146 = sadd.s32 %s145, 1
      %p149 = scmp.eq.s32.totalorder %s27, 1
      %p150 = scmp.ne.s32.totalorder %s145, %s147
      %p151 = scmp.eq.s32.totalorder %s27, 0
      %p152 = por %p150, %p151
      %p153 = scmp.ne.s32.totalorder %s145, %s147
      %p154 = scmp.eq.s32.totalorder %s32, 1
      %p155 = por %p153, %p154
      %p156 = scmp.ne.s32.totalorder %s147, %s148
      %p157 = scmp.eq.s32.totalorder %s32, 0
      %p158 = por %p156, %p157
      %p159 = scmp.ne.s32.totalorder %s147, %s148
      %p160 = scmp.eq.s32.totalorder %s33, 1
      %p161 = por %p159, %p160
      %p163 = scmp.ne.s32.totalorder %s148, %s162
      %p164 = scmp.eq.s32.totalorder %s33, 0
      %p165 = por %p163, %p164
      %s167 = sadd.s32 %s166, 1
      %p170 = scmp.eq.s32.totalorder %s27, 1
      %p171 = scmp.ne.s32.totalorder %s166, %s168
      %p172 = scmp.eq.s32.totalorder %s27, 0
      %p173 = por %p171, %p172
      %p174 = scmp.ne.s32.totalorder %s166, %s168
      %p175 = scmp.eq.s32.totalorder %s32, 1
      %p176 = por %p174, %p175
      %p177 = scmp.ne.s32.totalorder %s168, %s169
      %p178 = scmp.eq.s32.totalorder %s32, 0
      %p179 = por %p177, %p178
      %p180 = scmp.ne.s32.totalorder %s168, %s169
      %p181 = scmp.eq.s32.totalorder %s33, 1
      %p182 = por %p180, %p181
      %p184 = scmp.ne.s32.totalorder %s169, %s183
      %p185 = scmp.eq.s32.totalorder %s33, 0
      %p186 = por %p184, %p185
      %s188 = sadd.s32 %s187, 1
      %p191 = scmp.eq.s32.totalorder %s27, 1
      %p192 = scmp.ne.s32.totalorder %s187, %s189
      %p193 = scmp.eq.s32.totalorder %s27, 0
      %p194 = por %p192, %p193
      %p195 = scmp.ne.s32.totalorder %s187, %s189
      %p196 = scmp.eq.s32.totalorder %s32, 1
      %p197 = por %p195, %p196
      %p198 = scmp.ne.s32.totalorder %s189, %s190
      %p199 = scmp.eq.s32.totalorder %s32, 0
      %p200 = por %p198, %p199
      %p201 = scmp.ne.s32.totalorder %s189, %s190
      %p202 = scmp.eq.s32.totalorder %s33, 1
      %p203 = por %p201, %p202
      %p205 = scmp.ne.s32.totalorder %s190, %s204
      %p206 = scmp.eq.s32.totalorder %s33, 0
      %p207 = por %p205, %p206
      %s209 = sadd.s32 %s208, 1
      %p212 = scmp.eq.s32.totalorder %s27, 1
      %p213 = scmp.ne.s32.totalorder %s208, %s210
      %p214 = scmp.eq.s32.totalorder %s27, 0
      %p215 = por %p213, %p214
      %p216 = scmp.ne.s32.totalorder %s208, %s210
      %p217 = scmp.eq.s32.totalorder %s32, 1
      %p218 = por %p216, %p217
      %p219 = scmp.ne.s32.totalorder %s210, %s211
      %p220 = scmp.eq.s32.totalorder %s32, 0
      %p221 = por %p219, %p220
      %p222 = scmp.ne.s32.totalorder %s210, %s211
      %p223 = scmp.eq.s32.totalorder %s33, 1
      %p224 = por %p222, %p223
      %p226 = scmp.ne.s32.totalorder %s211, %s225
      %p227 = scmp.eq.s32.totalorder %s33, 0
      %p228 = por %p226, %p227
      %s230 = sadd.s32 %s229, 1
      %p233 = scmp.eq.s32.totalorder %s27, 1
      %p234 = scmp.ne.s32.totalorder %s229, %s231
      %p235 = scmp.eq.s32.totalorder %s27, 0
      %p236 = por %p234, %p235
      %p237 = scmp.ne.s32.totalorder %s229, %s231
      %p238 = scmp.eq.s32.totalorder %s32, 1
      %p239 = por %p237, %p238
      %p240 = scmp.ne.s32.totalorder %s231, %s232
      %p241 = scmp.eq.s32.totalorder %s32, 0
      %p242 = por %p240, %p241
      %p243 = scmp.ne.s32.totalorder %s231, %s232
      %p244 = scmp.eq.s32.totalorder %s33, 1
      %p245 = por %p243, %p244
      %p247 = scmp.ne.s32.totalorder %s232, %s246
      %p248 = scmp.eq.s32.totalorder %s33, 0
      %p249 = por %p247, %p248
      %s250 = ssub.s32 %s34, %s46
      %s251 = ssub.s32 %s35, %s42
      %s252 = sor.u32 %s250, %s251
      %p253 = scmp.eq.s32.totalorder %s252, 0
      %s255 = sadd.s32 %s254, 1
      %s256 = scalar_select %p253, %s254, %s255
      %p259 = pneg %p253
      %p260 = scmp.eq.s32.totalorder %s27, 1
      %p261 = por %p259, %p260
      %p262 = scmp.ne.s32.totalorder %s254, %s257
      %p263 = scmp.eq.s32.totalorder %s27, 0
      %p264 = por %p262, %p263
      %p265 = scmp.ne.s32.totalorder %s254, %s257
      %p266 = scmp.eq.s32.totalorder %s32, 1
      %p267 = por %p265, %p266
      %p268 = scmp.ne.s32.totalorder %s257, %s258
      %p269 = scmp.eq.s32.totalorder %s32, 0
      %p270 = por %p268, %p269
      %p271 = scmp.ne.s32.totalorder %s257, %s258
      %p272 = scmp.eq.s32.totalorder %s33, 1
      %p273 = por %p271, %p272
      %p275 = scmp.ne.s32.totalorder %s258, %s274
      %p276 = scmp.eq.s32.totalorder %s33, 0
      %p277 = por %p275, %p276
      %s278 = ssub.s32 %s34, %s46
      %s279 = ssub.s32 %s35, %s42
      %s280 = sor.u32 %s278, %s279
      %p281 = scmp.eq.s32.totalorder %s280, 0
      %s283 = sadd.s32 %s282, 1
      %s284 = scalar_select %p281, %s282, %s283
      %p287 = pneg %p281
      %p288 = scmp.eq.s32.totalorder %s27, 1
      %p289 = por %p287, %p288
      %p290 = scmp.ne.s32.totalorder %s282, %s285
      %p291 = scmp.eq.s32.totalorder %s27, 0
      %p292 = por %p290, %p291
      %p293 = scmp.ne.s32.totalorder %s282, %s285
      %p294 = scmp.eq.s32.totalorder %s32, 1
      %p295 = por %p293, %p294
      %p296 = scmp.ne.s32.totalorder %s285, %s286
      %p297 = scmp.eq.s32.totalorder %s32, 0
      %p298 = por %p296, %p297
      %p299 = scmp.ne.s32.totalorder %s285, %s286
      %p300 = scmp.eq.s32.totalorder %s33, 1
      %p301 = por %p299, %p300
      %p303 = scmp.ne.s32.totalorder %s286, %s302
      %p304 = scmp.eq.s32.totalorder %s33, 0
      %p305 = por %p303, %p304
      %p306 = scmp.le.s32.totalorder 1, %s27
      %p307 = scmp.lt.s32.totalorder %s27, 3
      %p308 = pnand %p306, %p307
      %p309 = pneg %p308
      // Predicated region
      $region9: #{tpu_custom_call.1} parent=5 // pred_check
        _
      $region10: #{tpu_custom_call.1} parent=5 // pred_check_branch
        %311 = sbr.rel (%p308) target = $region12
      $region11: #{tpu_custom_call.1} parent=5 // pred_region
        %s312 = ssub.s32 %s27, 1
        // Predicated region
        $region13: #{tpu_custom_call.1} parent=11 // pred_check
          %p313 = pneg %p116
        $region14: #{tpu_custom_call.1} parent=11 // pred_check_branch
          %315 = sbr.rel (%p313) target = $region16
        $region15: #{tpu_custom_call.1} parent=11 // pred_region
          _
        $region16: #{tpu_custom_call.1} parent=11 // pred_fallthru
          _
        // Predicated region
        $region17: #{tpu_custom_call.1} parent=11 // pred_check
          %p316 = pneg %p137
        $region18: #{tpu_custom_call.1} parent=11 // pred_check_branch
          %318 = sbr.rel (%p316) target = $region20
        $region19: #{tpu_custom_call.1} parent=11 // pred_region
          _
        $region20: #{tpu_custom_call.1} parent=11 // pred_fallthru
          _
        // Predicated region
        $region21: #{tpu_custom_call.1} parent=11 // pred_check
          %p319 = pneg %p158
        $region22: #{tpu_custom_call.1} parent=11 // pred_check_branch
          %321 = sbr.rel (%p319) target = $region24
        $region23: #{tpu_custom_call.1} parent=11 // pred_region
          %s323 = ssub.s32 512, 512
          %324 = vsyncadd [#allocation6], %s323
          %s325 = sshll.u32 [#allocation5], 4
          %s326 = int_to_ptr.vmem [resolvable:$true] %s325
          %331 = dma.hbm_to_vmem [thread:$0]  %s4, 512, %s326, [#allocation6], 128, 128, 8
        $region24: #{tpu_custom_call.1} parent=11 // pred_fallthru
          _
        // Predicated region
        $region25: #{tpu_custom_call.1} parent=11 // pred_check
          %p332 = pneg %p179
        $region26: #{tpu_custom_call.1} parent=11 // pred_check_branch
          %334 = sbr.rel (%p332) target = $region28
        $region27: #{tpu_custom_call.1} parent=11 // pred_region
          %s336 = ssub.s32 512, 512
          %337 = vsyncadd [#allocation6], %s336
          %s338 = sshll.u32 [#allocation7], 4
          %s339 = int_to_ptr.vmem [resolvable:$true] %s338
          %344 = dma.hbm_to_vmem [thread:$0]  %s5, 512, %s339, [#allocation6], 128, 128, 8
        $region28: #{tpu_custom_call.1} parent=11 // pred_fallthru
          _
        // Predicated region
        $region29: #{tpu_custom_call.1} parent=11 // pred_check
          %p345 = pneg %p200
        $region30: #{tpu_custom_call.1} parent=11 // pred_check_branch
          %347 = sbr.rel (%p345) target = $region32
        $region31: #{tpu_custom_call.1} parent=11 // pred_region
          _
        $region32: #{tpu_custom_call.1} parent=11 // pred_fallthru
          _
        // Predicated region
        $region33: #{tpu_custom_call.1} parent=11 // pred_check
          %p348 = pneg %p221
        $region34: #{tpu_custom_call.1} parent=11 // pred_check_branch
          %350 = sbr.rel (%p348) target = $region36
        $region35: #{tpu_custom_call.1} parent=11 // pred_region
          _
        $region36: #{tpu_custom_call.1} parent=11 // pred_fallthru
          _
        // Predicated region
        $region37: #{tpu_custom_call.1} parent=11 // pred_check
          %p351 = pneg %p242
        $region38: #{tpu_custom_call.1} parent=11 // pred_check_branch
          %353 = sbr.rel (%p351) target = $region40
        $region39: #{tpu_custom_call.1} parent=11 // pred_region
          _
        $region40: #{tpu_custom_call.1} parent=11 // pred_fallthru
          _
      $region12: #{tpu_custom_call.1} parent=5 // pred_fallthru
        _
      %p354 = scmp.lt.s32.totalorder %s27, 2
      // Predicated region
      $region41: #{tpu_custom_call.1} parent=5 // pred_check
        %p355 = pneg %p354
      $region42: #{tpu_custom_call.1} parent=5 // pred_check_branch
        %357 = sbr.rel (%p355) target = $region44
      $region43: #{tpu_custom_call.1} parent=5 // pred_region
        // Predicated region
        $region45: #{tpu_custom_call.1} parent=43 // pred_check
          %p358 = pneg %p61
        $region46: #{tpu_custom_call.1} parent=43 // pred_check_branch
          %360 = sbr.rel (%p358) target = $region48
        $region47: #{tpu_custom_call.1} parent=43 // pred_region
          %s361 = smul.u32 2, %s35
          %p362 = scmp.lt.s32.totalorder %s34, 1
          %s363 = scalar_select %p362, %s34, 1
          %p364 = scmp.lt.s32.totalorder %s361, 1
          %s365 = scalar_select %p364, %s361, 1
          %s366 = smul.addr %s363, 8
          %s367 = sadd.s32 %s365, %s366
          %s368 = smul.addr %s367, 8
          %s369 = scalar_lea.vmem %s0, %s368
          %s370 = smul.u32 2, %s35
        $region48: #{tpu_custom_call.1} parent=43 // pred_fallthru
          _
        // Predicated region
        $region49: #{tpu_custom_call.1} parent=43 // pred_check
          %p371 = pneg %p89
        $region50: #{tpu_custom_call.1} parent=43 // pred_check_branch
          %373 = sbr.rel (%p371) target = $region52
        $region51: #{tpu_custom_call.1} parent=43 // pred_region
          %s374 = sand.u32 %s79, 1
          %s375 = scalar_lea.sflag [#allocation3], %s374
          %s376 = sand.u32 %s79, 1
          %s377 = smul.addr %s376, 32
          %s378 = scalar_lea.vmem [#allocation2], %s377
          %s379 = smul.u32 2, %s35
          %s381 = ssub.s32 512, 512
          %382 = vsyncadd %s375, %s381
          %s383 = smul.addr %s34, 4
          %s384 = sadd.s32 %s379, %s383
          %s385 = smul.addr %s384, 128
          %s386 = scalar_lea.hbm %s1, %s385
          %s387 = sshll.u32 %s378, 4
          %s388 = int_to_ptr.vmem [resolvable:$true] %s387
          %393 = dma.hbm_to_vmem [thread:$0]  %s386, 512, %s388, %s375, 256, 256, 16
        $region52: #{tpu_custom_call.1} parent=43 // pred_fallthru
          _
      $region44: #{tpu_custom_call.1} parent=5 // pred_fallthru
        _
      %p394 = scmp.le.s32.totalorder 1, %s27
      %p395 = scmp.lt.s32.totalorder %s27, 3
      %p396 = pnand %p394, %p395
      %p397 = pneg %p396
      // Predicated region
      $region53: #{tpu_custom_call.1} parent=5 // pred_check
        _
      $region54: #{tpu_custom_call.1} parent=5 // pred_check_branch
        %399 = sbr.rel (%p396) target = $region56
      $region55: #{tpu_custom_call.1} parent=5 // pred_region
        %s400 = ssub.s32 %s27, 1
        %s401 = sand.u32 %s82, 1
        %s402 = scalar_lea.sflag [#allocation3], %s401
        %s403 = sand.u32 %s82, 1
        %s404 = smul.addr %s403, 32
        %s405 = scalar_lea.vmem [#allocation2], %s404
        // Predicated region
        $region57: #{tpu_custom_call.1} parent=55 // pred_check
          %p406 = pneg %p95
        $region58: #{tpu_custom_call.1} parent=55 // pred_check_branch
          %408 = sbr.rel (%p406) target = $region60
        $region59: #{tpu_custom_call.1} parent=55 // pred_region
          %409 = dma.done %s402, 512
        $region60: #{tpu_custom_call.1} parent=55 // pred_fallthru
          _
        // Predicated region
        $region61: #{tpu_custom_call.1} parent=55 // pred_check
          %p410 = pneg %p158
        $region62: #{tpu_custom_call.1} parent=55 // pred_check_branch
          %412 = sbr.rel (%p410) target = $region64
        $region63: #{tpu_custom_call.1} parent=55 // pred_region
          %413 = dma.done [#allocation6], 512
        $region64: #{tpu_custom_call.1} parent=55 // pred_fallthru
          _
        // Predicated region
        $region65: #{tpu_custom_call.1} parent=55 // pred_check
          %p414 = pneg %p179
        $region66: #{tpu_custom_call.1} parent=55 // pred_check_branch
          %416 = sbr.rel (%p414) target = $region68
        $region67: #{tpu_custom_call.1} parent=55 // pred_region
          %417 = dma.done [#allocation6], 512
        $region68: #{tpu_custom_call.1} parent=55 // pred_fallthru
          _
        %s418 = smul.u32 2, %s37
        %p419 = scmp.lt.s32.totalorder %s36, 1
        %s420 = scalar_select %p419, %s36, 1
        %p421 = scmp.lt.s32.totalorder %s418, 1
        %s422 = scalar_select %p421, %s418, 1
        %s423 = smul.addr %s420, 8
        %s424 = sadd.s32 %s422, %s423
        %s425 = smul.addr %s424, 8
        %s426 = scalar_lea.vmem %s0, %s425
        %p427 = pneg %p67
        %p428 = pneg %p64
        %s429 = sand.u32 %s82, 1
        %s430 = scalar_lea.sflag [#allocation3], %s429
        %s431 = sand.u32 %s82, 1
        %s432 = smul.addr %s431, 32
        %s433 = scalar_lea.vmem [#allocation2], %s432
        %p434 = pneg %p95
        %p435 = pneg %p92
        %p436 = pneg %p116
        %p437 = pneg %p113
        %p438 = pneg %p137
        %p439 = pneg %p134
        %p440 = pneg %p158
        %p441 = pneg %p155
        %p442 = pneg %p179
        %p443 = pneg %p176
        %p444 = pneg %p200
        %p445 = pneg %p197
        %p446 = pneg %p221
        %p447 = pneg %p218
        %p448 = pneg %p242
        %p449 = pneg %p239
        %p450 = pneg %p270
        %p451 = pneg %p267
        %s452 = sand.u32 %s257, 1
        %s453 = scalar_lea.sflag [#allocation4], %s452
        %s454 = sand.u32 %s257, 1
        %s455 = smul.addr %s454, 64
        %s456 = scalar_lea.vmem [#allocation8], %s455
        %p457 = pneg %p298
        %p458 = pneg %p295
        %s459 = sand.u32 %s285, 1
        %s460 = scalar_lea.sflag [#allocation10], %s459
        %s461 = sand.u32 %s285, 1
        %s462 = smul.addr %s461, 32
        %s463 = scalar_lea.vmem [#allocation9], %s462
        %s464 = smul.u32 2, %s37
        %p465 = scmp.lt.s32.totalorder %s36, 1
        %s466 = scalar_select %p465, %s36, 1
        %p467 = scmp.lt.s32.totalorder %s464, 1
        %s468 = scalar_select %p467, %s464, 1
        %s469 = smul.addr %s466, 8
        %s470 = sadd.s32 %s468, %s469
        %s471 = smul.addr %s470, 8
        %s472 = scalar_lea.vmem %s0, %s471
        %s473 = smul.u32 2, %s37
        %s474 = smul.u32 2, %s37
        %s475 = smul.u32 2, %s37
        %s476 = smul.u32 2, %s37
        %v477 = vld [vmem:[%s405] sm:$0xff]
        %v478 = vld [vmem:[%s405 + $0x8] sm:$0xff]
        %v479 = vld [vmem:[%s405 + $0x10] sm:$0xff]
        %v480 = vld [vmem:[%s405 + $0x18] sm:$0xff]
        %v481 = vld [vmem:[%s2] sm:$0xff]
        %v482 = vld [vmem:[%s2 + $0x8] sm:$0xff]
        %v483 = vld [vmem:[%s2 + $0x10] sm:$0xff]
        %v484 = vld [vmem:[%s2 + $0x18] sm:$0xff]
        %v485 = vld [vmem:[%s3] sm:$0xff]
        %v486 = vld [vmem:[%s3 + $0x8] sm:$0xff]
        %v487 = vld [vmem:[%s3 + $0x10] sm:$0xff]
        %v488 = vld [vmem:[%s3 + $0x18] sm:$0xff]
        %490 = vset.pattern.permute.xlu0 0
        %491 = vperm.xlu0 %490, %v485
        %v492 = vpop.permute.xlu0 %491
        %495 = vset.pattern.permute.xlu0 0
        %496 = vperm.xlu0 %495, %v486
        %v497 = vpop.permute.xlu0 %496
        %500 = vset.pattern.permute.xlu0 0
        %501 = vperm.xlu0 %500, %v487
        %v502 = vpop.permute.xlu0 %501
        %505 = vset.pattern.permute.xlu0 0
        %506 = vperm.xlu0 %505, %v488
        %v507 = vpop.permute.xlu0 %506
        %vm509 = vcmask 130048
        %v511 = vsel %vm509, %v481, 0
        %v514 = vsel %vm509, %v482, 0
        %v517 = vsel %vm509, %v483, 0
        %v520 = vsel %vm509, %v484, 0
        %522 = vmatprep.subr.mxu0 %v478
        %523 = vmatpush1.msra.mxu0 %v477
        %524 = vmatprep.subr.mxu0 %v480
        %525 = vmatpush1.msra.mxu0 %v479
        %526 = vmatprep.subr.mxu0 0.0
        %527 = vmatpush1.msra.mxu0 0.0
        %528 = vmatprep.subr.mxu0 0.0
        %529 = vmatpush1.msra.mxu0 0.0
        %530 = vmatprep.subr.mxu0 0.0
        %531 = vmatpush1.msra.mxu0 0.0
        %532 = vmatprep.subr.mxu0 0.0
        %533 = vmatpush1.msra.mxu0 0.0
        %534 = vmatprep.subr.mxu0 0.0
        %535 = vmatpush1.msra.mxu0 0.0
        %536 = vmatprep.subr.mxu0 0.0
        %537 = vmatpush1.msra.mxu0 0.0
        %538 = vmatprep.subr.mxu0 0.0
        %539 = vmatpush1.msra.mxu0 0.0
        %540 = vmatprep.subr.mxu0 0.0
        %541 = vmatpush1.msra.mxu0 0.0
        %542 = vmatprep.subr.mxu0 0.0
        %543 = vmatpush1.msra.mxu0 0.0
        %544 = vmatprep.subr.mxu0 0.0
        %545 = vmatpush1.msra.mxu0 0.0
        %546 = vmatprep.subr.mxu0 0.0
        %547 = vmatpush1.msra.mxu0 0.0
        %548 = vmatprep.subr.mxu0 0.0
        %549 = vmatpush1.msra.mxu0 0.0
        %550 = vmatprep.subr.mxu0 0.0
        %551 = vmatpush1.msra.mxu0 0.0
        %552 = vmatprep.subr.mxu0 0.0
        %553 = vmatpush1.msra.mxu0 0.0
        %554 = vmatprep.subr.mxu0 0.0
        %555 = vmatpush1.msra.mxu0 0.0
        %556 = vmatprep.subr.mxu0 0.0
        %557 = vmatpush1.msra.mxu0 0.0
        %558 = vmatprep.subr.mxu0 0.0
        %559 = vmatpush1.msra.mxu0 0.0
        %560 = vmatprep.subr.mxu0 0.0
        %561 = vmatpush1.msra.mxu0 0.0
        %562 = vmatprep.subr.mxu0 0.0
        %563 = vmatpush1.msra.mxu0 0.0
        %564 = vmatprep.subr.mxu0 0.0
        %565 = vmatpush1.msra.mxu0 0.0
        %566 = vmatprep.subr.mxu0 0.0
        %567 = vmatpush1.msra.mxu0 0.0
        %568 = vmatprep.subr.mxu0 0.0
        %569 = vmatpush1.msra.mxu0 0.0
        %570 = vmatprep.subr.mxu0 0.0
        %571 = vmatpush1.msra.mxu0 0.0
        %572 = vmatprep.subr.mxu0 0.0
        %573 = vmatpush1.msra.mxu0 0.0
        %574 = vmatprep.subr.mxu0 0.0
        %575 = vmatpush1.msra.mxu0 0.0
        %576 = vmatprep.subr.mxu0 0.0
        %577 = vmatpush1.msra.mxu0 0.0
        %578 = vmatprep.subr.mxu0 0.0
        %579 = vmatpush1.msra.mxu0 0.0
        %580 = vmatprep.subr.mxu0 0.0
        %581 = vmatpush1.msra.mxu0 0.0
        %582 = vmatprep.subr.mxu0 0.0
        %583 = vmatpush1.msra.mxu0 0.0
        %584 = vmatprep.subr.mxu0 0.0
        %585 = vmatpush1.msra.mxu0 0.0
        %586 = vmatprep.mubr.f32.mxu0 0.0
        %587 = vmatmul.mubr.f32.gmra.mrb[0].mxu0 %v511
        %v588 = vpop.f32.mrb[0].mxu0
        %v589 = vadd.f32 %v492, %v588
        %v590 = vpop.f32.mrb[0].mxu0
        %v591 = vadd.f32 %v492, %v590
        %592 = vmatprep.mubr.f32.mxu0 0.0
        %593 = vmatmul.mubr.f32.gmra.mrb[0].mxu0 %v514
        %v594 = vpop.f32.mrb[0].mxu0
        %v595 = vadd.f32 %v497, %v594
        %v596 = vpop.f32.mrb[0].mxu0
        %v597 = vadd.f32 %v497, %v596
        %598 = vmatprep.mubr.f32.mxu0 0.0
        %599 = vmatmul.mubr.f32.gmra.mrb[0].mxu0 %v517
        %v600 = vpop.f32.mrb[0].mxu0
        %v601 = vadd.f32 %v502, %v600
        %v602 = vpop.f32.mrb[0].mxu0
        %v603 = vadd.f32 %v502, %v602
        %604 = vmatprep.mubr.f32.mxu0 0.0
        %605 = vmatmul.mubr.f32.gmra.mrb[0].mxu0 %v520
        %v606 = vpop.f32.mrb[0].mxu0
        %v607 = vadd.f32 %v507, %v606
        %v608 = vpop.f32.mrb[0].mxu0
        %v609 = vadd.f32 %v507, %v608
        %610 = vdwg.mxu0
        %v611 = vmul.f32 %v589, 0.5
        %v612 = vmul.f32 %v591, 0.5
        %v613 = vmul.f32 %v595, 0.5
        %v614 = vmul.f32 %v597, 0.5
        %v615 = vmul.f32 %v601, 0.5
        %v616 = vmul.f32 %v603, 0.5
        %v617 = vmul.f32 %v607, 0.5
        %v618 = vmul.f32 %v609, 0.5
        %v619 = vmul.f32 %v589, 0.70710677
        %v620 = vmul.f32 %v591, 0.70710677
        %v621 = vmul.f32 %v595, 0.70710677
        %v622 = vmul.f32 %v597, 0.70710677
        %v623 = vmul.f32 %v601, 0.70710677
        %v624 = vmul.f32 %v603, 0.70710677
        %v625 = vmul.f32 %v607, 0.70710677
        %v626 = vmul.f32 %v609, 0.70710677
        %v627 = verf.f32.pop %v619
        %v628 = verf.f32.pop %v620
        %v629 = verf.f32.pop %v621
        %v630 = verf.f32.pop %v622
        %v631 = verf.f32.pop %v623
        %v632 = verf.f32.pop %v624
        %v633 = verf.f32.pop %v625
        %v634 = verf.f32.pop %v626
        %v635 = vadd.f32 %v627, 1.0
        %v636 = vadd.f32 %v628, 1.0
        %v637 = vadd.f32 %v629, 1.0
        %v638 = vadd.f32 %v630, 1.0
        %v639 = vadd.f32 %v631, 1.0
        %v640 = vadd.f32 %v632, 1.0
        %v641 = vadd.f32 %v633, 1.0
        %v642 = vadd.f32 %v634, 1.0
        %v643 = vmul.f32 %v611, %v635
        %v644 = vmul.f32 %v612, %v636
        %v645 = vmul.f32 %v613, %v637
        %v646 = vmul.f32 %v614, %v638
        %v647 = vmul.f32 %v615, %v639
        %v648 = vmul.f32 %v616, %v640
        %v649 = vmul.f32 %v617, %v641
        %v650 = vmul.f32 %v618, %v642
        %v651 = vld [vmem:[%s472] sm:$0xff]
        %v652 = vld [vmem:[%s472 + $0x8] sm:$0xff]
        %v653 = vld [vmem:[%s472 + $0x10] sm:$0xff]
        %v654 = vld [vmem:[%s472 + $0x18] sm:$0xff]
        %v655 = vld [vmem:[%s472 + $0x20] sm:$0xff]
        %v656 = vld [vmem:[%s472 + $0x28] sm:$0xff]
        %v657 = vld [vmem:[%s472 + $0x30] sm:$0xff]
        %v658 = vld [vmem:[%s472 + $0x38] sm:$0xff]
        %v659 = vmul.f32 %v651, 0.5
        %v660 = vmul.f32 %v652, 0.5
        %v661 = vmul.f32 %v653, 0.5
        %v662 = vmul.f32 %v654, 0.5
        %v663 = vmul.f32 %v655, 0.5
        %v664 = vmul.f32 %v656, 0.5
        %v665 = vmul.f32 %v657, 0.5
        %v666 = vmul.f32 %v658, 0.5
        %v667 = vmul.f32 %v651, 0.70710677
        %v668 = vmul.f32 %v652, 0.70710677
        %v669 = vmul.f32 %v653, 0.70710677
        %v670 = vmul.f32 %v654, 0.70710677
        %v671 = vmul.f32 %v655, 0.70710677
        %v672 = vmul.f32 %v656, 0.70710677
        %v673 = vmul.f32 %v657, 0.70710677
        %v674 = vmul.f32 %v658, 0.70710677
        %v675 = verf.f32.pop %v667
        %v676 = verf.f32.pop %v668
        %v677 = verf.f32.pop %v669
        %v678 = verf.f32.pop %v670
        %v679 = verf.f32.pop %v671
        %v680 = verf.f32.pop %v672
        %v681 = verf.f32.pop %v673
        %v682 = verf.f32.pop %v674
        %v683 = vadd.f32 %v675, 1.0
        %v684 = vadd.f32 %v676, 1.0
        %v685 = vadd.f32 %v677, 1.0
        %v686 = vadd.f32 %v678, 1.0
        %v687 = vadd.f32 %v679, 1.0
        %v688 = vadd.f32 %v680, 1.0
        %v689 = vadd.f32 %v681, 1.0
        %v690 = vadd.f32 %v682, 1.0
        %v691 = vmul.f32 %v659, %v683
        %v692 = vmul.f32 %v660, %v684
        %v693 = vmul.f32 %v661, %v685
        %v694 = vmul.f32 %v662, %v686
        %v695 = vmul.f32 %v663, %v687
        %v696 = vmul.f32 %v664, %v688
        %v697 = vmul.f32 %v665, %v689
        %v698 = vmul.f32 %v666, %v690
        %v699 = vld [vmem:[#allocation5] sm:$0xff]
        %v700 = vld [vmem:[#allocation5 + $0x8] sm:$0xff]
        %v701 = vld [vmem:[#allocation5 + $0x10] sm:$0xff]
        %v702 = vld [vmem:[#allocation5 + $0x18] sm:$0xff]
        %v703 = vld [vmem:[#allocation7] sm:$0xff]
        %v704 = vld [vmem:[#allocation7 + $0x8] sm:$0xff]
        %v705 = vld [vmem:[#allocation7 + $0x10] sm:$0xff]
        %v706 = vld [vmem:[#allocation7 + $0x18] sm:$0xff]
        %vm707 = vcmask 261120
        %v709 = vsel %vm707, %v703, 0
        %v712 = vsel %vm707, %v704, 0
        %v715 = vsel %vm707, %v705, 0
        %v718 = vsel %vm707, %v706, 0
        %720 = vmatprep.subr.mxu0 %v692
        %721 = vmatpush1.msra.mxu0 %v691
        %722 = vmatprep.subr.mxu0 %v694
        %723 = vmatpush1.msra.mxu0 %v693
        %724 = vmatprep.subr.mxu0 %v696
        %725 = vmatpush1.msra.mxu0 %v695
        %726 = vmatprep.subr.mxu0 %v698
        %727 = vmatpush1.msra.mxu0 %v697
        %728 = vmatprep.subr.mxu0 0.0
        %729 = vmatpush1.msra.mxu0 0.0
        %730 = vmatprep.subr.mxu0 0.0
        %731 = vmatpush1.msra.mxu0 0.0
        %732 = vmatprep.subr.mxu0 0.0
        %733 = vmatpush1.msra.mxu0 0.0
        %734 = vmatprep.subr.mxu0 0.0
        %735 = vmatpush1.msra.mxu0 0.0
        %736 = vmatprep.subr.mxu0 0.0
        %737 = vmatpush1.msra.mxu0 0.0
        %738 = vmatprep.subr.mxu0 0.0
        %739 = vmatpush1.msra.mxu0 0.0
        %740 = vmatprep.subr.mxu0 0.0
        %741 = vmatpush1.msra.mxu0 0.0
        %742 = vmatprep.subr.mxu0 0.0
        %743 = vmatpush1.msra.mxu0 0.0
        %744 = vmatprep.subr.mxu0 0.0
        %745 = vmatpush1.msra.mxu0 0.0
        %746 = vmatprep.subr.mxu0 0.0
        %747 = vmatpush1.msra.mxu0 0.0
        %748 = vmatprep.subr.mxu0 0.0
        %749 = vmatpush1.msra.mxu0 0.0
        %750 = vmatprep.subr.mxu0 0.0
        %751 = vmatpush1.msra.mxu0 0.0
        %752 = vmatprep.subr.mxu0 0.0
        %753 = vmatpush1.msra.mxu0 0.0
        %754 = vmatprep.subr.mxu0 0.0
        %755 = vmatpush1.msra.mxu0 0.0
        %756 = vmatprep.subr.mxu0 0.0
        %757 = vmatpush1.msra.mxu0 0.0
        %758 = vmatprep.subr.mxu0 0.0
        %759 = vmatpush1.msra.mxu0 0.0
        %760 = vmatprep.subr.mxu0 0.0
        %761 = vmatpush1.msra.mxu0 0.0
        %762 = vmatprep.subr.mxu0 0.0
        %763 = vmatpush1.msra.mxu0 0.0
        %764 = vmatprep.subr.mxu0 0.0
        %765 = vmatpush1.msra.mxu0 0.0
        %766 = vmatprep.subr.mxu0 0.0
        %767 = vmatpush1.msra.mxu0 0.0
        %768 = vmatprep.subr.mxu0 0.0
        %769 = vmatpush1.msra.mxu0 0.0
        %770 = vmatprep.subr.mxu0 0.0
        %771 = vmatpush1.msra.mxu0 0.0
        %772 = vmatprep.subr.mxu0 0.0
        %773 = vmatpush1.msra.mxu0 0.0
        %774 = vmatprep.subr.mxu0 0.0
        %775 = vmatpush1.msra.mxu0 0.0
        %776 = vmatprep.subr.mxu0 0.0
        %777 = vmatpush1.msra.mxu0 0.0
        %778 = vmatprep.subr.mxu0 0.0
        %779 = vmatpush1.msra.mxu0 0.0
        %780 = vmatprep.subr.mxu0 0.0
        %781 = vmatpush1.msra.mxu0 0.0
        %782 = vmatprep.subr.mxu0 0.0
        %783 = vmatpush1.msra.mxu0 0.0
        %784 = vmatprep.mubr.f32.mxu0 0.0
        %785 = vmatmul.mubr.f32.gmra.mrb[0].mxu0 %v709
        %v786 = vpop.f32.mrb[0].mxu0
        %v787 = vadd.f32 0.0, %v786
        %v788 = vpop.f32.mrb[0].mxu0
        %v789 = vadd.f32 0.0, %v788
        %790 = vmatprep.mubr.f32.mxu0 0.0
        %791 = vmatmul.mubr.f32.gmra.mrb[0].mxu0 %v712
        %v792 = vpop.f32.mrb[0].mxu0
        %v793 = vadd.f32 0.0, %v792
        %v794 = vpop.f32.mrb[0].mxu0
        %v795 = vadd.f32 0.0, %v794
        %796 = vmatprep.mubr.f32.mxu0 0.0
        %797 = vmatmul.mubr.f32.gmra.mrb[0].mxu0 %v715
        %v798 = vpop.f32.mrb[0].mxu0
        %v799 = vadd.f32 0.0, %v798
        %v800 = vpop.f32.mrb[0].mxu0
        %v801 = vadd.f32 0.0, %v800
        %802 = vmatprep.mubr.f32.mxu0 0.0
        %803 = vmatmul.mubr.f32.gmra.mrb[0].mxu0 %v718
        %v804 = vpop.f32.mrb[0].mxu0
        %v805 = vadd.f32 0.0, %v804
        %v806 = vpop.f32.mrb[0].mxu0
        %v807 = vadd.f32 0.0, %v806
        %808 = vdwg.mxu0
        %v810 = vsel %vm707, %v699, 0
        %v813 = vsel %vm707, %v700, 0
        %v816 = vsel %vm707, %v701, 0
        %v819 = vsel %vm707, %v702, 0
        %821 = vmatprep.subr.mxu0 %v644
        %822 = vmatpush1.msra.mxu0 %v643
        %823 = vmatprep.subr.mxu0 %v646
        %824 = vmatpush1.msra.mxu0 %v645
        %825 = vmatprep.subr.mxu0 %v648
        %826 = vmatpush1.msra.mxu0 %v647
        %827 = vmatprep.subr.mxu0 %v650
        %828 = vmatpush1.msra.mxu0 %v649
        %829 = vmatprep.subr.mxu0 0.0
        %830 = vmatpush1.msra.mxu0 0.0
        %831 = vmatprep.subr.mxu0 0.0
        %832 = vmatpush1.msra.mxu0 0.0
        %833 = vmatprep.subr.mxu0 0.0
        %834 = vmatpush1.msra.mxu0 0.0
        %835 = vmatprep.subr.mxu0 0.0
        %836 = vmatpush1.msra.mxu0 0.0
        %837 = vmatprep.subr.mxu0 0.0
        %838 = vmatpush1.msra.mxu0 0.0
        %839 = vmatprep.subr.mxu0 0.0
        %840 = vmatpush1.msra.mxu0 0.0
        %841 = vmatprep.subr.mxu0 0.0
        %842 = vmatpush1.msra.mxu0 0.0
        %843 = vmatprep.subr.mxu0 0.0
        %844 = vmatpush1.msra.mxu0 0.0
        %845 = vmatprep.subr.mxu0 0.0
        %846 = vmatpush1.msra.mxu0 0.0
        %847 = vmatprep.subr.mxu0 0.0
        %848 = vmatpush1.msra.mxu0 0.0
        %849 = vmatprep.subr.mxu0 0.0
        %850 = vmatpush1.msra.mxu0 0.0
        %851 = vmatprep.subr.mxu0 0.0
        %852 = vmatpush1.msra.mxu0 0.0
        %853 = vmatprep.subr.mxu0 0.0
        %854 = vmatpush1.msra.mxu0 0.0
        %855 = vmatprep.subr.mxu0 0.0
        %856 = vmatpush1.msra.mxu0 0.0
        %857 = vmatprep.subr.mxu0 0.0
        %858 = vmatpush1.msra.mxu0 0.0
        %859 = vmatprep.subr.mxu0 0.0
        %860 = vmatpush1.msra.mxu0 0.0
        %861 = vmatprep.subr.mxu0 0.0
        %862 = vmatpush1.msra.mxu0 0.0
        %863 = vmatprep.subr.mxu0 0.0
        %864 = vmatpush1.msra.mxu0 0.0
        %865 = vmatprep.subr.mxu0 0.0
        %866 = vmatpush1.msra.mxu0 0.0
        %867 = vmatprep.subr.mxu0 0.0
        %868 = vmatpush1.msra.mxu0 0.0
        %869 = vmatprep.subr.mxu0 0.0
        %870 = vmatpush1.msra.mxu0 0.0
        %871 = vmatprep.subr.mxu0 0.0
        %872 = vmatpush1.msra.mxu0 0.0
        %873 = vmatprep.subr.mxu0 0.0
        %874 = vmatpush1.msra.mxu0 0.0
        %875 = vmatprep.subr.mxu0 0.0
        %876 = vmatpush1.msra.mxu0 0.0
        %877 = vmatprep.subr.mxu0 0.0
        %878 = vmatpush1.msra.mxu0 0.0
        %879 = vmatprep.subr.mxu0 0.0
        %880 = vmatpush1.msra.mxu0 0.0
        %881 = vmatprep.subr.mxu0 0.0
        %882 = vmatpush1.msra.mxu0 0.0
        %883 = vmatprep.subr.mxu0 0.0
        %884 = vmatpush1.msra.mxu0 0.0
        %885 = vmatprep.mubr.f32.mxu0 0.0
        %886 = vmatmul.mubr.f32.gmra.mrb[0].mxu0 %v810
        %v887 = vpop.f32.mrb[0].mxu0
        %v888 = vadd.f32 %v787, %v887
        %v889 = vpop.f32.mrb[0].mxu0
        %v890 = vadd.f32 %v789, %v889
        %891 = vmatprep.mubr.f32.mxu0 0.0
        %892 = vmatmul.mubr.f32.gmra.mrb[0].mxu0 %v813
        %v893 = vpop.f32.mrb[0].mxu0
        %v894 = vadd.f32 %v793, %v893
        %v895 = vpop.f32.mrb[0].mxu0
        %v896 = vadd.f32 %v795, %v895
        %897 = vmatprep.mubr.f32.mxu0 0.0
        %898 = vmatmul.mubr.f32.gmra.mrb[0].mxu0 %v816
        %v899 = vpop.f32.mrb[0].mxu0
        %v900 = vadd.f32 %v799, %v899
        %v901 = vpop.f32.mrb[0].mxu0
        %v902 = vadd.f32 %v801, %v901
        %903 = vmatprep.mubr.f32.mxu0 0.0
        %904 = vmatmul.mubr.f32.gmra.mrb[0].mxu0 %v819
        %v905 = vpop.f32.mrb[0].mxu0
        %v906 = vadd.f32 %v805, %v905
        %v907 = vpop.f32.mrb[0].mxu0
        %v908 = vadd.f32 %v807, %v907
        %909 = vdwg.mxu0
        %v910 = vld [vmem:[%s6] sm:$0xff]
        %v911 = vld [vmem:[%s6 + $0x8] sm:$0xff]
        %v912 = vld [vmem:[%s6 + $0x10] sm:$0xff]
        %v913 = vld [vmem:[%s6 + $0x18] sm:$0xff]
        %915 = vset.pattern.permute.xlu0 0
        %916 = vperm.xlu0 %915, %v910
        %v917 = vpop.permute.xlu0 %916
        %920 = vset.pattern.permute.xlu0 0
        %921 = vperm.xlu0 %920, %v911
        %v922 = vpop.permute.xlu0 %921
        %925 = vset.pattern.permute.xlu0 0
        %926 = vperm.xlu0 %925, %v912
        %v927 = vpop.permute.xlu0 %926
        %930 = vset.pattern.permute.xlu0 0
        %931 = vperm.xlu0 %930, %v913
        %v932 = vpop.permute.xlu0 %931
        %v934 = vadd.f32 %v888, %v917
        %v935 = vadd.f32 %v890, %v917
        %v936 = vadd.f32 %v894, %v922
        %v937 = vadd.f32 %v896, %v922
        %v938 = vadd.f32 %v900, %v927
        %v939 = vadd.f32 %v902, %v927
        %v940 = vadd.f32 %v906, %v932
        %v941 = vadd.f32 %v908, %v932
        %v942 = vld [vmem:[%s7] sm:$0xff]
        %v943 = vld [vmem:[%s7 + $0x8] sm:$0xff]
        %v944 = vld [vmem:[%s8] sm:$0xff]
        %v945 = vld [vmem:[%s8 + $0x8] sm:$0xff]
        %947 = vset.pattern.permute.xlu0 0
        %948 = vperm.xlu0 %947, %v944
        %v949 = vpop.permute.xlu0 %948
        %952 = vset.pattern.permute.xlu0 0
        %953 = vperm.xlu0 %952, %v945
        %v954 = vpop.permute.xlu0 %953
        %v957 = vsel %vm707, %v942, 0
        %v960 = vsel %vm707, %v943, 0
        %962 = vmatprep.subr.mxu0 %v935
        %963 = vmatpush1.msra.mxu0 %v934
        %964 = vmatprep.subr.mxu0 %v937
        %965 = vmatpush1.msra.mxu0 %v936
        %966 = vmatprep.subr.mxu0 %v939
        %967 = vmatpush1.msra.mxu0 %v938
        %968 = vmatprep.subr.mxu0 %v941
        %969 = vmatpush1.msra.mxu0 %v940
        %970 = vmatprep.subr.mxu0 0.0
        %971 = vmatpush1.msra.mxu0 0.0
        %972 = vmatprep.subr.mxu0 0.0
        %973 = vmatpush1.msra.mxu0 0.0
        %974 = vmatprep.subr.mxu0 0.0
        %975 = vmatpush1.msra.mxu0 0.0
        %976 = vmatprep.subr.mxu0 0.0
        %977 = vmatpush1.msra.mxu0 0.0
        %978 = vmatprep.subr.mxu0 0.0
        %979 = vmatpush1.msra.mxu0 0.0
        %980 = vmatprep.subr.mxu0 0.0
        %981 = vmatpush1.msra.mxu0 0.0
        %982 = vmatprep.subr.mxu0 0.0
        %983 = vmatpush1.msra.mxu0 0.0
        %984 = vmatprep.subr.mxu0 0.0
        %985 = vmatpush1.msra.mxu0 0.0
        %986 = vmatprep.subr.mxu0 0.0
        %987 = vmatpush1.msra.mxu0 0.0
        %988 = vmatprep.subr.mxu0 0.0
        %989 = vmatpush1.msra.mxu0 0.0
        %990 = vmatprep.subr.mxu0 0.0
        %991 = vmatpush1.msra.mxu0 0.0
        %992 = vmatprep.subr.mxu0 0.0
        %993 = vmatpush1.msra.mxu0 0.0
        %994 = vmatprep.subr.mxu0 0.0
        %995 = vmatpush1.msra.mxu0 0.0
        %996 = vmatprep.subr.mxu0 0.0
        %997 = vmatpush1.msra.mxu0 0.0
        %998 = vmatprep.subr.mxu0 0.0
        %999 = vmatpush1.msra.mxu0 0.0
        %1000 = vmatprep.subr.mxu0 0.0
        %1001 = vmatpush1.msra.mxu0 0.0
        %1002 = vmatprep.subr.mxu0 0.0
        %1003 = vmatpush1.msra.mxu0 0.0
        %1004 = vmatprep.subr.mxu0 0.0
        %1005 = vmatpush1.msra.mxu0 0.0
        %1006 = vmatprep.subr.mxu0 0.0
        %1007 = vmatpush1.msra.mxu0 0.0
        %1008 = vmatprep.subr.mxu0 0.0
        %1009 = vmatpush1.msra.mxu0 0.0
        %1010 = vmatprep.subr.mxu0 0.0
        %1011 = vmatpush1.msra.mxu0 0.0
        %1012 = vmatprep.subr.mxu0 0.0
        %1013 = vmatpush1.msra.mxu0 0.0
        %1014 = vmatprep.subr.mxu0 0.0
        %1015 = vmatpush1.msra.mxu0 0.0
        %1016 = vmatprep.subr.mxu0 0.0
        %1017 = vmatpush1.msra.mxu0 0.0
        %1018 = vmatprep.subr.mxu0 0.0
        %1019 = vmatpush1.msra.mxu0 0.0
        %1020 = vmatprep.subr.mxu0 0.0
        %1021 = vmatpush1.msra.mxu0 0.0
        %1022 = vmatprep.subr.mxu0 0.0
        %1023 = vmatpush1.msra.mxu0 0.0
        %1024 = vmatprep.subr.mxu0 0.0
        %1025 = vmatpush1.msra.mxu0 0.0
        %1026 = vmatprep.mubr.f32.mxu0 0.0
        %1027 = vmatmul.mubr.f32.gmra.mrb[0].mxu0 %v957
        %v1028 = vpop.f32.mrb[0].mxu0
        %v1029 = vadd.f32 %v949, %v1028
        %v1030 = vpop.f32.mrb[0].mxu0
        %v1031 = vadd.f32 %v949, %v1030
        %1032 = vmatprep.mubr.f32.mxu0 0.0
        %1033 = vmatmul.mubr.f32.gmra.mrb[0].mxu0 %v960
        %v1034 = vpop.f32.mrb[0].mxu0
        %v1035 = vadd.f32 %v954, %v1034
        %v1036 = vpop.f32.mrb[0].mxu0
        %v1037 = vadd.f32 %v954, %v1036
        %1038 = vdwg.mxu0
        %v1039 = vadd.f32 %v1029, %v477
        %v1040 = vadd.f32 %v1031, %v478
        %v1041 = vadd.f32 %v1035, %v479
        %v1042 = vadd.f32 %v1037, %v480
        %v1043 = vmul.f32 %v1039, 0.5
        %v1044 = vmul.f32 %v1040, 0.5
        %v1045 = vmul.f32 %v1041, 0.5
        %v1046 = vmul.f32 %v1042, 0.5
        %v1047 = vmul.f32 %v1039, 0.70710677
        %v1048 = vmul.f32 %v1040, 0.70710677
        %v1049 = vmul.f32 %v1041, 0.70710677
        %v1050 = vmul.f32 %v1042, 0.70710677
        %v1051 = verf.f32.pop %v1047
        %v1052 = verf.f32.pop %v1048
        %v1053 = verf.f32.pop %v1049
        %v1054 = verf.f32.pop %v1050
        %v1055 = vadd.f32 %v1051, 1.0
        %v1056 = vadd.f32 %v1052, 1.0
        %v1057 = vadd.f32 %v1053, 1.0
        %v1058 = vadd.f32 %v1054, 1.0
        %v1059 = vmul.f32 %v1043, %v1055
        %v1060 = vmul.f32 %v1044, %v1056
        %v1061 = vmul.f32 %v1045, %v1057
        %v1062 = vmul.f32 %v1046, %v1058
        %1063 = vst [vmem:[%s456] sm:$0xff] %v934
        %1064 = vst [vmem:[%s456 + $0x8] sm:$0xff] %v935
        %1065 = vst [vmem:[%s456 + $0x10] sm:$0xff] %v936
        %1066 = vst [vmem:[%s456 + $0x18] sm:$0xff] %v937
        %1067 = vst [vmem:[%s456 + $0x20] sm:$0xff] %v938
        %1068 = vst [vmem:[%s456 + $0x28] sm:$0xff] %v939
        %1069 = vst [vmem:[%s456 + $0x30] sm:$0xff] %v940
        %1070 = vst [vmem:[%s456 + $0x38] sm:$0xff] %v941
        %1071 = vst [vmem:[%s463] sm:$0xff] %v1059
        %1072 = vst [vmem:[%s463 + $0x8] sm:$0xff] %v1060
        %1073 = vst [vmem:[%s463 + $0x10] sm:$0xff] %v1061
        %1074 = vst [vmem:[%s463 + $0x18] sm:$0xff] %v1062
        %s1075 = sand.u32 %s257, 1
        %s1076 = scalar_lea.sflag [#allocation4], %s1075
        %s1077 = sand.u32 %s257, 1
        %s1078 = smul.addr %s1077, 64
        %s1079 = scalar_lea.vmem [#allocation8], %s1078
        %s1080 = sand.u32 %s285, 1
        %s1081 = scalar_lea.sflag [#allocation10], %s1080
        %s1082 = sand.u32 %s285, 1
        %s1083 = smul.addr %s1082, 32
        %s1084 = scalar_lea.vmem [#allocation9], %s1083
        // Predicated region
        $region69: #{tpu_custom_call.1} parent=55 // pred_check
          %p1085 = pneg %p267
        $region70: #{tpu_custom_call.1} parent=55 // pred_check_branch
          %1087 = sbr.rel (%p1085) target = $region72
        $region71: #{tpu_custom_call.1} parent=55 // pred_region
          %s1088 = smul.u32 2, %s37
          %s1090 = ssub.s32 1024, 1024
          %1091 = vsyncadd %s1076, %s1090
          %s1092 = smul.addr %s36, 8
          %s1093 = sadd.s32 %s1088, %s1092
          %s1094 = smul.addr %s1093, 128
          %s1095 = scalar_lea.hbm %s9, %s1094
          %s1096 = sshll.u32 %s1079, 4
          %s1097 = int_to_ptr.vmem [resolvable:$true] %s1096
          %1102 = dma.vmem_to_hbm [thread:$0]  %s1097, 1024, %s1095, %s1076, 256, 256, 16
        $region72: #{tpu_custom_call.1} parent=55 // pred_fallthru
          _
        // Predicated region
        $region73: #{tpu_custom_call.1} parent=55 // pred_check
          %p1103 = pneg %p295
        $region74: #{tpu_custom_call.1} parent=55 // pred_check_branch
          %1105 = sbr.rel (%p1103) target = $region76
        $region75: #{tpu_custom_call.1} parent=55 // pred_region
          %s1106 = smul.u32 2, %s37
          %s1108 = ssub.s32 512, 512
          %1109 = vsyncadd %s1081, %s1108
          %s1110 = smul.addr %s36, 4
          %s1111 = sadd.s32 %s1106, %s1110
          %s1112 = smul.addr %s1111, 128
          %s1113 = scalar_lea.hbm %s10, %s1112
          %s1114 = sshll.u32 %s1084, 4
          %s1115 = int_to_ptr.vmem [resolvable:$true] %s1114
          %1120 = dma.vmem_to_hbm [thread:$0]  %s1115, 512, %s1113, %s1081, 256, 256, 16
        $region76: #{tpu_custom_call.1} parent=55 // pred_fallthru
          _
      $region56: #{tpu_custom_call.1} parent=5 // pred_fallthru
        _
      %p1121 = scmp.le.s32.totalorder 2, %s27
      // Predicated region
      $region77: #{tpu_custom_call.1} parent=5 // pred_check
        %p1122 = pneg %p1121
      $region78: #{tpu_custom_call.1} parent=5 // pred_check_branch
        %1124 = sbr.rel (%p1122) target = $region80
      $region79: #{tpu_custom_call.1} parent=5 // pred_region
        %s1125 = ssub.s32 %s27, 2
        // Predicated region
        $region81: #{tpu_custom_call.1} parent=79 // pred_check
          %p1126 = pneg %p273
        $region82: #{tpu_custom_call.1} parent=79 // pred_check_branch
          %1128 = sbr.rel (%p1126) target = $region84
        $region83: #{tpu_custom_call.1} parent=79 // pred_region
          %s1129 = sand.u32 %s258, 1
          %s1130 = scalar_lea.sflag [#allocation4], %s1129
          %s1131 = sand.u32 %s258, 1
          %s1132 = smul.addr %s1131, 64
          %s1133 = scalar_lea.vmem [#allocation8], %s1132
          %1134 = dma.done %s1130, 1024
        $region84: #{tpu_custom_call.1} parent=79 // pred_fallthru
          _
        // Predicated region
        $region85: #{tpu_custom_call.1} parent=79 // pred_check
          %p1135 = pneg %p301
        $region86: #{tpu_custom_call.1} parent=79 // pred_check_branch
          %1137 = sbr.rel (%p1135) target = $region88
        $region87: #{tpu_custom_call.1} parent=79 // pred_region
          %s1138 = sand.u32 %s286, 1
          %s1139 = scalar_lea.sflag [#allocation10], %s1138
          %s1140 = sand.u32 %s286, 1
          %s1141 = smul.addr %s1140, 32
          %s1142 = scalar_lea.vmem [#allocation9], %s1141
          %1143 = dma.done %s1139, 512
        $region88: #{tpu_custom_call.1} parent=79 // pred_fallthru
          _
      $region80: #{tpu_custom_call.1} parent=5 // pred_fallthru
        _
    $region6: #{tpu_custom_call.1} parent=1 // loop_footer
      %s31 = sadd.s32 1, %s27
    $region7: #{tpu_custom_call.1} parent=1 // loop_footer_branch
      %26 = sbr.rel target = $region3
    $region8: #{tpu_custom_call.1} parent=1 // loop_exit
      _
    %1144 = vsyncpa [#allocation3], 1
    %s1145 = scalar_lea.sflag [#allocation3], 1
    %1146 = vsyncpa %s1145, 1
    %1147 = vsyncpa [#allocation6], 1
    %1148 = vsyncpa [#allocation4], 1
    %s1149 = scalar_lea.sflag [#allocation4], 1
    %1150 = vsyncpa %s1149, 1
    %1151 = vsyncpa [#allocation10], 1
    %s1152 = scalar_lea.sflag [#allocation10], 1
    %1153 = vsyncpa %s1152, 1

// kernel: tpu_custom_call.1
$region0: #{tpu_custom_call.1}
  #allocation0 [shape = 'u32[]', space=smem, size = 0x4, offset = 0x4, fixed_abs, tag = 'smem constant byte address 0x4 - core index']
  #allocation1 [shape = 'u32[144,128]{1,0:T(1,128)}', space=vmem, size = 0x12000, scoped, tag = 'internal scratch']
  %s0 = inlined_call_operand.vmem [shape: f32[2,32,256], index: 0, kind: input, shape index: {}]
  %s1 = inlined_call_operand.hbm [shape: f32[2,16,256], index: 1, kind: input, shape index: {}]
  %s2 = inlined_call_operand.vmem [shape: f32[32,16], index: 2, kind: input, shape index: {}]
  %s3 = inlined_call_operand.vmem [shape: f32[32,1], index: 3, kind: input, shape index: {}]
  %s4 = inlined_call_operand.hbm [shape: f32[32,32], index: 4, kind: input, shape index: {}]
  %s5 = inlined_call_operand.hbm [shape: f32[32,32], index: 5, kind: input, shape index: {}]
  %s6 = inlined_call_operand.vmem [shape: f32[32,1], index: 6, kind: input, shape index: {}]
  %s7 = inlined_call_operand.vmem [shape: f32[16,32], index: 7, kind: input, shape index: {}]
  %s8 = inlined_call_operand.vmem [shape: f32[16,1], index: 8, kind: input, shape index: {}]
  %s9 = inlined_call_operand.hbm [shape: f32[2,32,256], index: 9, kind: output, shape index: {0}]
  %s10 = inlined_call_operand.hbm [shape: f32[2,16,256], index: 10, kind: output, shape index: {1}]
  %11 = xla_tuple %s9, %s10
  %s12 = sld [smem:[#allocation0]]
  $region89: #{tpu_custom_call.1} parent=0
    _
  %s14 = ssub.s32 1, %s12
  %s15 = scalar_select 0, %s14, %s12
  $region1: #{tpu_custom_call.1} parent=0
    #allocation2 [shape = 'u8[32768]{0}', space=vmem, size = 0x8000, scoped, tag = 'input window, operand 1']
    #allocation3 [shape = 's32[2]{0}', space=sflag, size = 0x8, scoped, tag = 'scoped memory for tpu_custom_call.1']
    #allocation4 [shape = 's32[2]{0}', space=sflag, size = 0x8, scoped, tag = 'scoped memory for tpu_custom_call.1']
    #allocation5 [shape = 'u8[16384]{0}', space=vmem, size = 0x4000, scoped, tag = 'input window, operand 4, single buffered']
    #allocation6 [shape = 's32[1]{0}', space=sflag, size = 0x4, scoped, tag = 'scoped memory for tpu_custom_call.1']
    #allocation7 [shape = 'u8[16384]{0}', space=vmem, size = 0x4000, scoped, tag = 'input window, operand 5, single buffered']
    #allocation8 [shape = 'u8[65536]{0}', space=vmem, size = 0x10000, scoped, tag = 'output window, operand 0']
    #allocation9 [shape = 'u8[32768]{0}', space=vmem, size = 0x8000, scoped, tag = 'output window, operand 1']
    #allocation10 [shape = 's32[2]{0}', space=sflag, size = 0x8, scoped, tag = 'scoped memory for tpu_custom_call.1']
    %16 = vsyncpa [#allocation3], 0
    %s17 = scalar_lea.sflag [#allocation3], 1
    %18 = vsyncpa %s17, 0
    %19 = vsyncpa [#allocation6], 0
    %20 = vsyncpa [#allocation4], 0
    %s21 = scalar_lea.sflag [#allocation4], 1
    %22 = vsyncpa %s21, 0
    %23 = vsyncpa [#allocation10], 0
    %s24 = scalar_lea.sflag [#allocation10], 1
    %25 = vsyncpa %s24, 0
    loop: start=0, step=1, limit=4
    $region2: #{tpu_custom_call.1} parent=1 // loop_pre_header
      _
    $region3: #{tpu_custom_call.1} parent=1 // loop_header
      %s27 = sphi 0, %s31
      %p28 = scmp.ge.s32.totalorder %s27, 4
      %s34 = sphi 0, %s46
      %s35 = sphi 0, %s42
      %s36 = sphi 0, %s34
      %s37 = sphi 0, %s35
      %s38 = sphi 0, %s36
      %s39 = sphi 0, %s37
      %s51 = sphi 0, %s53
      %s54 = sphi 0, %s51
      %s55 = sphi 0, %s54
      %s71 = sphi 0, %s55
      %s79 = sphi 0, %s81
      %s82 = sphi 0, %s79
      %s83 = sphi 0, %s82
      %s99 = sphi 0, %s83
      %s103 = sphi 0, %s103
      %s105 = sphi 0, %s103
      %s106 = sphi 0, %s105
      %s120 = sphi 0, %s106
      %s124 = sphi 0, %s124
      %s126 = sphi 0, %s124
      %s127 = sphi 0, %s126
      %s141 = sphi 0, %s127
      %s145 = sphi 0, %s145
      %s147 = sphi 0, %s145
      %s148 = sphi 0, %s147
      %s162 = sphi 0, %s148
      %s166 = sphi 0, %s166
      %s168 = sphi 0, %s166
      %s169 = sphi 0, %s168
      %s183 = sphi 0, %s169
      %s187 = sphi 0, %s187
      %s189 = sphi 0, %s187
      %s190 = sphi 0, %s189
      %s204 = sphi 0, %s190
      %s208 = sphi 0, %s208
      %s210 = sphi 0, %s208
      %s211 = sphi 0, %s210
      %s225 = sphi 0, %s211
      %s229 = sphi 0, %s229
      %s231 = sphi 0, %s229
      %s232 = sphi 0, %s231
      %s246 = sphi 0, %s232
      %s254 = sphi 0, %s256
      %s257 = sphi 0, %s254
      %s258 = sphi 0, %s257
      %s274 = sphi 0, %s258
      %s282 = sphi 0, %s284
      %s285 = sphi 0, %s282
      %s286 = sphi 0, %s285
      %s302 = sphi 0, %s286
    $region4: #{tpu_custom_call.1} parent=1 // loop_header_branch
      %30 = sbr.rel (%p28) target = $region8
    $region5: #{tpu_custom_call.1} parent=1 // loop_body
      %s32 = ssub.s32 %s27, 1
      %s33 = ssub.s32 %s27, 2
      %s40 = sadd.s32 1, %s35
      %p41 = scmp.ge.s32.totalorder %s40, 1
      %s42 = scalar_select %p41, 0, %s40
      %s43 = sadd.s32 1, %s34
      %s44 = scalar_select %p41, %s43, %s34
      %p45 = scmp.ge.s32.totalorder %s44, 2
      %s46 = scalar_select %p45, 0, %s44
      %s47 = ssub.s32 %s34, %s46
      %s48 = ssub.s32 %s35, %s42
      %s49 = sor.u32 %s47, %s48
      %p50 = scmp.eq.s32.totalorder %s49, 0
      %s52 = sadd.s32 %s51, 1
      %s53 = scalar_select %p50, %s51, %s52
      %p56 = pneg %p50
      %p57 = scmp.eq.s32.totalorder %s27, 1
      %p58 = por %p56, %p57
      %p59 = scmp.ne.s32.totalorder %s51, %s54
      %p60 = scmp.eq.s32.totalorder %s27, 0
      %p61 = por %p59, %p60
      %p62 = scmp.ne.s32.totalorder %s51, %s54
      %p63 = scmp.eq.s32.totalorder %s32, 1
      %p64 = por %p62, %p63
      %p65 = scmp.ne.s32.totalorder %s54, %s55
      %p66 = scmp.eq.s32.totalorder %s32, 0
      %p67 = por %p65, %p66
      %p68 = scmp.ne.s32.totalorder %s54, %s55
      %p69 = scmp.eq.s32.totalorder %s33, 1
      %p70 = por %p68, %p69
      %p72 = scmp.ne.s32.totalorder %s55, %s71
      %p73 = scmp.eq.s32.totalorder %s33, 0
      %p74 = por %p72, %p73
      %s75 = ssub.s32 %s34, %s46
      %s76 = ssub.s32 %s35, %s42
      %s77 = sor.u32 %s75, %s76
      %p78 = scmp.eq.s32.totalorder %s77, 0
      %s80 = sadd.s32 %s79, 1
      %s81 = scalar_select %p78, %s79, %s80
      %p84 = pneg %p78
      %p85 = scmp.eq.s32.totalorder %s27, 1
      %p86 = por %p84, %p85
      %p87 = scmp.ne.s32.totalorder %s79, %s82
      %p88 = scmp.eq.s32.totalorder %s27, 0
      %p89 = por %p87, %p88
      %p90 = scmp.ne.s32.totalorder %s79, %s82
      %p91 = scmp.eq.s32.totalorder %s32, 1
      %p92 = por %p90, %p91
      %p93 = scmp.ne.s32.totalorder %s82, %s83
      %p94 = scmp.eq.s32.totalorder %s32, 0
      %p95 = por %p93, %p94
      %p96 = scmp.ne.s32.totalorder %s82, %s83
      %p97 = scmp.eq.s32.totalorder %s33, 1
      %p98 = por %p96, %p97
      %p100 = scmp.ne.s32.totalorder %s83, %s99
      %p101 = scmp.eq.s32.totalorder %s33, 0
      %p102 = por %p100, %p101
      %s104 = sadd.s32 %s103, 1
      %p107 = scmp.eq.s32.totalorder %s27, 1
      %p108 = scmp.ne.s32.totalorder %s103, %s105
      %p109 = scmp.eq.s32.totalorder %s27, 0
      %p110 = por %p108, %p109
      %p111 = scmp.ne.s32.totalorder %s103, %s105
      %p112 = scmp.eq.s32.totalorder %s32, 1
      %p113 = por %p111, %p112
      %p114 = scmp.ne.s32.totalorder %s105, %s106
      %p115 = scmp.eq.s32.totalorder %s32, 0
      %p116 = por %p114, %p115
      %p117 = scmp.ne.s32.totalorder %s105, %s106
      %p118 = scmp.eq.s32.totalorder %s33, 1
      %p119 = por %p117, %p118
      %p121 = scmp.ne.s32.totalorder %s106, %s120
      %p122 = scmp.eq.s32.totalorder %s33, 0
      %p123 = por %p121, %p122
      %s125 = sadd.s32 %s124, 1
      %p128 = scmp.eq.s32.totalorder %s27, 1
      %p129 = scmp.ne.s32.totalorder %s124, %s126
      %p130 = scmp.eq.s32.totalorder %s27, 0
      %p131 = por %p129, %p130
      %p132 = scmp.ne.s32.totalorder %s124, %s126
      %p133 = scmp.eq.s32.totalorder %s32, 1
      %p134 = por %p132, %p133
      %p135 = scmp.ne.s32.totalorder %s126, %s127
      %p136 = scmp.eq.s32.totalorder %s32, 0
      %p137 = por %p135, %p136
      %p138 = scmp.ne.s32.totalorder %s126, %s127
      %p139 = scmp.eq.s32.totalorder %s33, 1
      %p140 = por %p138, %p139
      %p142 = scmp.ne.s32.totalorder %s127, %s141
      %p143 = scmp.eq.s32.totalorder %s33, 0
      %p144 = por %p142, %p143
      %s146 = sadd.s32 %s145, 1
      %p149 = scmp.eq.s32.totalorder %s27, 1
      %p150 = scmp.ne.s32.totalorder %s145, %s147
      %p151 = scmp.eq.s32.totalorder %s27, 0
      %p152 = por %p150, %p151
      %p153 = scmp.ne.s32.totalorder %s145, %s147
      %p154 = scmp.eq.s32.totalorder %s32, 1
      %p155 = por %p153, %p154
      %p156 = scmp.ne.s32.totalorder %s147, %s148
      %p157 = scmp.eq.s32.totalorder %s32, 0
      %p158 = por %p156, %p157
      %p159 = scmp.ne.s32.totalorder %s147, %s148
      %p160 = scmp.eq.s32.totalorder %s33, 1
      %p161 = por %p159, %p160
      %p163 = scmp.ne.s32.totalorder %s148, %s162
      %p164 = scmp.eq.s32.totalorder %s33, 0
      %p165 = por %p163, %p164
      %s167 = sadd.s32 %s166, 1
      %p170 = scmp.eq.s32.totalorder %s27, 1
      %p171 = scmp.ne.s32.totalorder %s166, %s168
      %p172 = scmp.eq.s32.totalorder %s27, 0
      %p173 = por %p171, %p172
      %p174 = scmp.ne.s32.totalorder %s166, %s168
      %p175 = scmp.eq.s32.totalorder %s32, 1
      %p176 = por %p174, %p175
      %p177 = scmp.ne.s32.totalorder %s168, %s169
      %p178 = scmp.eq.s32.totalorder %s32, 0
      %p179 = por %p177, %p178
      %p180 = scmp.ne.s32.totalorder %s168, %s169
      %p181 = scmp.eq.s32.totalorder %s33, 1
      %p182 = por %p180, %p181
      %p184 = scmp.ne.s32.totalorder %s169, %s183
      %p185 = scmp.eq.s32.totalorder %s33, 0
      %p186 = por %p184, %p185
      %s188 = sadd.s32 %s187, 1
      %p191 = scmp.eq.s32.totalorder %s27, 1
      %p192 = scmp.ne.s32.totalorder %s187, %s189
      %p193 = scmp.eq.s32.totalorder %s27, 0
      %p194 = por %p192, %p193
      %p195 = scmp.ne.s32.totalorder %s187, %s189
      %p196 = scmp.eq.s32.totalorder %s32, 1
      %p197 = por %p195, %p196
      %p198 = scmp.ne.s32.totalorder %s189, %s190
      %p199 = scmp.eq.s32.totalorder %s32, 0
      %p200 = por %p198, %p199
      %p201 = scmp.ne.s32.totalorder %s189, %s190
      %p202 = scmp.eq.s32.totalorder %s33, 1
      %p203 = por %p201, %p202
      %p205 = scmp.ne.s32.totalorder %s190, %s204
      %p206 = scmp.eq.s32.totalorder %s33, 0
      %p207 = por %p205, %p206
      %s209 = sadd.s32 %s208, 1
      %p212 = scmp.eq.s32.totalorder %s27, 1
      %p213 = scmp.ne.s32.totalorder %s208, %s210
      %p214 = scmp.eq.s32.totalorder %s27, 0
      %p215 = por %p213, %p214
      %p216 = scmp.ne.s32.totalorder %s208, %s210
      %p217 = scmp.eq.s32.totalorder %s32, 1
      %p218 = por %p216, %p217
      %p219 = scmp.ne.s32.totalorder %s210, %s211
      %p220 = scmp.eq.s32.totalorder %s32, 0
      %p221 = por %p219, %p220
      %p222 = scmp.ne.s32.totalorder %s210, %s211
      %p223 = scmp.eq.s32.totalorder %s33, 1
      %p224 = por %p222, %p223
      %p226 = scmp.ne.s32.totalorder %s211, %s225
      %p227 = scmp.eq.s32.totalorder %s33, 0
      %p228 = por %p226, %p227
      %s230 = sadd.s32 %s229, 1
      %p233 = scmp.eq.s32.totalorder %s27, 1
      %p234 = scmp.ne.s32.totalorder %s229, %s231
      %p235 = scmp.eq.s32.totalorder %s27, 0
      %p236 = por %p234, %p235
      %p237 = scmp.ne.s32.totalorder %s229, %s231
      %p238 = scmp.eq.s32.totalorder %s32, 1
      %p239 = por %p237, %p238
      %p240 = scmp.ne.s32.totalorder %s231, %s232
      %p241 = scmp.eq.s32.totalorder %s32, 0
      %p242 = por %p240, %p241
      %p243 = scmp.ne.s32.totalorder %s231, %s232
      %p244 = scmp.eq.s32.totalorder %s33, 1
      %p245 = por %p243, %p244
      %p247 = scmp.ne.s32.totalorder %s232, %s246
      %p248 = scmp.eq.s32.totalorder %s33, 0
      %p249 = por %p247, %p248
      %s250 = ssub.s32 %s34, %s46
      %s251 = ssub.s32 %s35, %s42
      %s252 = sor.u32 %s250, %s251
      %p253 = scmp.eq.s32.totalorder %s252, 0
      %s255 = sadd.s32 %s254, 1
      %s256 = scalar_select %p253, %s254, %s255
      %p259 = pneg %p253
      %p260 = scmp.eq.s32.totalorder %s27, 1
      %p261 = por %p259, %p260
      %p262 = scmp.ne.s32.totalorder %s254, %s257
      %p263 = scmp.eq.s32.totalorder %s27, 0
      %p264 = por %p262, %p263
      %p265 = scmp.ne.s32.totalorder %s254, %s257
      %p266 = scmp.eq.s32.totalorder %s32, 1
      %p267 = por %p265, %p266
      %p268 = scmp.ne.s32.totalorder %s257, %s258
      %p269 = scmp.eq.s32.totalorder %s32, 0
      %p270 = por %p268, %p269
      %p271 = scmp.ne.s32.totalorder %s257, %s258
      %p272 = scmp.eq.s32.totalorder %s33, 1
      %p273 = por %p271, %p272
      %p275 = scmp.ne.s32.totalorder %s258, %s274
      %p276 = scmp.eq.s32.totalorder %s33, 0
      %p277 = por %p275, %p276
      %s278 = ssub.s32 %s34, %s46
      %s279 = ssub.s32 %s35, %s42
      %s280 = sor.u32 %s278, %s279
      %p281 = scmp.eq.s32.totalorder %s280, 0
      %s283 = sadd.s32 %s282, 1
      %s284 = scalar_select %p281, %s282, %s283
      %p287 = pneg %p281
      %p288 = scmp.eq.s32.totalorder %s27, 1
      %p289 = por %p287, %p288
      %p290 = scmp.ne.s32.totalorder %s282, %s285
      %p291 = scmp.eq.s32.totalorder %s27, 0
      %p292 = por %p290, %p291
      %p293 = scmp.ne.s32.totalorder %s282, %s285
      %p294 = scmp.eq.s32.totalorder %s32, 1
      %p295 = por %p293, %p294
      %p296 = scmp.ne.s32.totalorder %s285, %s286
      %p297 = scmp.eq.s32.totalorder %s32, 0
      %p298 = por %p296, %p297
      %p299 = scmp.ne.s32.totalorder %s285, %s286
      %p300 = scmp.eq.s32.totalorder %s33, 1
      %p301 = por %p299, %p300
      %p303 = scmp.ne.s32.totalorder %s286, %s302
      %p304 = scmp.eq.s32.totalorder %s33, 0
      %p305 = por %p303, %p304
      %p306 = scmp.le.s32.totalorder 1, %s27
      %p307 = scmp.lt.s32.totalorder %s27, 3
      %p308 = pnand %p306, %p307
      %p309 = pneg %p308
      // Predicated region
      $region9: #{tpu_custom_call.1} parent=5 // pred_check
        _
      $region10: #{tpu_custom_call.1} parent=5 // pred_check_branch
        %311 = sbr.rel (%p308) target = $region12
      $region11: #{tpu_custom_call.1} parent=5 // pred_region
        %s312 = ssub.s32 %s27, 1
        // Predicated region
        $region13: #{tpu_custom_call.1} parent=11 // pred_check
          %p313 = pneg %p116
        $region14: #{tpu_custom_call.1} parent=11 // pred_check_branch
          %315 = sbr.rel (%p313) target = $region16
        $region15: #{tpu_custom_call.1} parent=11 // pred_region
          _
        $region16: #{tpu_custom_call.1} parent=11 // pred_fallthru
          _
        // Predicated region
        $region17: #{tpu_custom_call.1} parent=11 // pred_check
          %p316 = pneg %p137
        $region18: #{tpu_custom_call.1} parent=11 // pred_check_branch
          %318 = sbr.rel (%p316) target = $region20
        $region19: #{tpu_custom_call.1} parent=11 // pred_region
          _
        $region20: #{tpu_custom_call.1} parent=11 // pred_fallthru
          _
        // Predicated region
        $region21: #{tpu_custom_call.1} parent=11 // pred_check
          %p319 = pneg %p158
        $region22: #{tpu_custom_call.1} parent=11 // pred_check_branch
          %321 = sbr.rel (%p319) target = $region24
        $region23: #{tpu_custom_call.1} parent=11 // pred_region
          %s323 = ssub.s32 512, 512
          %324 = vsyncadd [#allocation6], %s323
          %s325 = sshll.u32 [#allocation5], 4
          %s326 = int_to_ptr.vmem [resolvable:$true] %s325
          %331 = dma.hbm_to_vmem [thread:$0]  %s4, 512, %s326, [#allocation6], 128, 128, 8
        $region24: #{tpu_custom_call.1} parent=11 // pred_fallthru
          _
        // Predicated region
        $region25: #{tpu_custom_call.1} parent=11 // pred_check
          %p332 = pneg %p179
        $region26: #{tpu_custom_call.1} parent=11 // pred_check_branch
          %334 = sbr.rel (%p332) target = $region28
        $region27: #{tpu_custom_call.1} parent=11 // pred_region
          %s336 = ssub.s32 512, 512
          %337 = vsyncadd [#allocation6], %s336
          %s338 = sshll.u32 [#allocation7], 4
          %s339 = int_to_ptr.vmem [resolvable:$true] %s338
          %344 = dma.hbm_to_vmem [thread:$0]  %s5, 512, %s339, [#allocation6], 128, 128, 8
        $region28: #{tpu_custom_call.1} parent=11 // pred_fallthru
          _
        // Predicated region
        $region29: #{tpu_custom_call.1} parent=11 // pred_check
          %p345 = pneg %p200
        $region30: #{tpu_custom_call.1} parent=11 // pred_check_branch
          %347 = sbr.rel (%p345) target = $region32
        $region31: #{tpu_custom_call.1} parent=11 // pred_region
          _
        $region32: #{tpu_custom_call.1} parent=11 // pred_fallthru
          _
        // Predicated region
        $region33: #{tpu_custom_call.1} parent=11 // pred_check
          %p348 = pneg %p221
        $region34: #{tpu_custom_call.1} parent=11 // pred_check_branch
          %350 = sbr.rel (%p348) target = $region36
        $region35: #{tpu_custom_call.1} parent=11 // pred_region
          _
        $region36: #{tpu_custom_call.1} parent=11 // pred_fallthru
          _
        // Predicated region
        $region37: #{tpu_custom_call.1} parent=11 // pred_check
          %p351 = pneg %p242
        $region38: #{tpu_custom_call.1} parent=11 // pred_check_branch
          %353 = sbr.rel (%p351) target = $region40
        $region39: #{tpu_custom_call.1} parent=11 // pred_region
          _
        $region40: #{tpu_custom_call.1} parent=11 // pred_fallthru
          _
      $region12: #{tpu_custom_call.1} parent=5 // pred_fallthru
        _
      %p354 = scmp.lt.s32.totalorder %s27, 2
      // Predicated region
      $region41: #{tpu_custom_call.1} parent=5 // pred_check
        %p355 = pneg %p354
      $region42: #{tpu_custom_call.1} parent=5 // pred_check_branch
        %357 = sbr.rel (%p355) target = $region44
      $region43: #{tpu_custom_call.1} parent=5 // pred_region
        // Predicated region
        $region45: #{tpu_custom_call.1} parent=43 // pred_check
          %p358 = pneg %p61
        $region46: #{tpu_custom_call.1} parent=43 // pred_check_branch
          %360 = sbr.rel (%p358) target = $region48
        $region47: #{tpu_custom_call.1} parent=43 // pred_region
          %s361 = smul.u32 2, %s35
          %p362 = scmp.lt.s32.totalorder %s34, 1
          %s363 = scalar_select %p362, %s34, 1
          %p364 = scmp.lt.s32.totalorder %s361, 1
          %s365 = scalar_select %p364, %s361, 1
          %s366 = smul.addr %s363, 8
          %s367 = sadd.s32 %s365, %s366
          %s368 = smul.addr %s367, 8
          %s369 = scalar_lea.vmem %s0, %s368
          %s370 = smul.u32 2, %s35
        $region48: #{tpu_custom_call.1} parent=43 // pred_fallthru
          _
        // Predicated region
        $region49: #{tpu_custom_call.1} parent=43 // pred_check
          %p371 = pneg %p89
        $region50: #{tpu_custom_call.1} parent=43 // pred_check_branch
          %373 = sbr.rel (%p371) target = $region52
        $region51: #{tpu_custom_call.1} parent=43 // pred_region
          %s374 = sand.u32 %s79, 1
          %s375 = scalar_lea.sflag [#allocation3], %s374
          %s376 = sand.u32 %s79, 1
          %s377 = smul.addr %s376, 32
          %s378 = scalar_lea.vmem [#allocation2], %s377
          %s379 = smul.u32 2, %s35
          %s381 = ssub.s32 512, 512
          %382 = vsyncadd %s375, %s381
          %s383 = smul.addr %s34, 4
          %s384 = sadd.s32 %s379, %s383
          %s385 = smul.addr %s384, 128
          %s386 = scalar_lea.hbm %s1, %s385
          %s387 = sshll.u32 %s378, 4
          %s388 = int_to_ptr.vmem [resolvable:$true] %s387
          %393 = dma.hbm_to_vmem [thread:$0]  %s386, 512, %s388, %s375, 256, 256, 16
        $region52: #{tpu_custom_call.1} parent=43 // pred_fallthru
          _
      $region44: #{tpu_custom_call.1} parent=5 // pred_fallthru
        _
      %p394 = scmp.le.s32.totalorder 1, %s27
      %p395 = scmp.lt.s32.totalorder %s27, 3
      %p396 = pnand %p394, %p395
      %p397 = pneg %p396
      // Predicated region
      $region53: #{tpu_custom_call.1} parent=5 // pred_check
        _
      $region54: #{tpu_custom_call.1} parent=5 // pred_check_branch
        %399 = sbr.rel (%p396) target = $region56
      $region55: #{tpu_custom_call.1} parent=5 // pred_region
        %s400 = ssub.s32 %s27, 1
        %s401 = sand.u32 %s82, 1
        %s402 = scalar_lea.sflag [#allocation3], %s401
        %s403 = sand.u32 %s82, 1
        %s404 = smul.addr %s403, 32
        %s405 = scalar_lea.vmem [#allocation2], %s404
        // Predicated region
        $region57: #{tpu_custom_call.1} parent=55 // pred_check
          %p406 = pneg %p95
        $region58: #{tpu_custom_call.1} parent=55 // pred_check_branch
          %408 = sbr.rel (%p406) target = $region60
        $region59: #{tpu_custom_call.1} parent=55 // pred_region
          %409 = dma.done %s402, 512
        $region60: #{tpu_custom_call.1} parent=55 // pred_fallthru
          _
        // Predicated region
        $region61: #{tpu_custom_call.1} parent=55 // pred_check
          %p410 = pneg %p158
        $region62: #{tpu_custom_call.1} parent=55 // pred_check_branch
          %412 = sbr.rel (%p410) target = $region64
        $region63: #{tpu_custom_call.1} parent=55 // pred_region
          %413 = dma.done [#allocation6], 512
        $region64: #{tpu_custom_call.1} parent=55 // pred_fallthru
          _
        // Predicated region
        $region65: #{tpu_custom_call.1} parent=55 // pred_check
          %p414 = pneg %p179
        $region66: #{tpu_custom_call.1} parent=55 // pred_check_branch
          %416 = sbr.rel (%p414) target = $region68
        $region67: #{tpu_custom_call.1} parent=55 // pred_region
          %417 = dma.done [#allocation6], 512
        $region68: #{tpu_custom_call.1} parent=55 // pred_fallthru
          _
        %s418 = smul.u32 2, %s37
        %p419 = scmp.lt.s32.totalorder %s36, 1
        %s420 = scalar_select %p419, %s36, 1
        %p421 = scmp.lt.s32.totalorder %s418, 1
        %s422 = scalar_select %p421, %s418, 1
        %s423 = smul.addr %s420, 8
        %s424 = sadd.s32 %s422, %s423
        %s425 = smul.addr %s424, 8
        %s426 = scalar_lea.vmem %s0, %s425
        %p427 = pneg %p67
        %p428 = pneg %p64
        %s429 = sand.u32 %s82, 1
        %s430 = scalar_lea.sflag [#allocation3], %s429
        %s431 = sand.u32 %s82, 1
        %s432 = smul.addr %s431, 32
        %s433 = scalar_lea.vmem [#allocation2], %s432
        %p434 = pneg %p95
        %p435 = pneg %p92
        %p436 = pneg %p116
        %p437 = pneg %p113
        %p438 = pneg %p137
        %p439 = pneg %p134
        %p440 = pneg %p158
        %p441 = pneg %p155
        %p442 = pneg %p179
        %p443 = pneg %p176
        %p444 = pneg %p200
        %p445 = pneg %p197
        %p446 = pneg %p221
        %p447 = pneg %p218
        %p448 = pneg %p242
        %p449 = pneg %p239
        %p450 = pneg %p270
        %p451 = pneg %p267
        %s452 = sand.u32 %s257, 1
        %s453 = scalar_lea.sflag [#allocation4], %s452
        %s454 = sand.u32 %s257, 1
        %s455 = smul.addr %s454, 64
        %s456 = scalar_lea.vmem [#allocation8], %s455
        %p457 = pneg %p298
        %p458 = pneg %p295
        %s459 = sand.u32 %s285, 1
        %s460 = scalar_lea.sflag [#allocation10], %s459
        %s461 = sand.u32 %s285, 1
        %s462 = smul.addr %s461, 32
        %s463 = scalar_lea.vmem [#allocation9], %s462
        %s464 = smul.u32 2, %s37
        %p465 = scmp.lt.s32.totalorder %s36, 1
        %s466 = scalar_select %p465, %s36, 1
        %p467 = scmp.lt.s32.totalorder %s464, 1
        %s468 = scalar_select %p467, %s464, 1
        %s469 = smul.addr %s466, 8
        %s470 = sadd.s32 %s468, %s469
        %s471 = smul.addr %s470, 8
        %s472 = scalar_lea.vmem %s0, %s471
        %s473 = smul.u32 2, %s37
        %s474 = smul.u32 2, %s37
        %s475 = smul.u32 2, %s37
        %s476 = smul.u32 2, %s37
        %v477 = vld [vmem:[%s405] sm:$0xff]
        %v478 = vld [vmem:[%s405 + $0x8] sm:$0xff]
        %v479 = vld [vmem:[%s405 + $0x10] sm:$0xff]
        %v480 = vld [vmem:[%s405 + $0x18] sm:$0xff]
        %v481 = vld [vmem:[%s2] sm:$0xff]
        %v482 = vld [vmem:[%s2 + $0x8] sm:$0xff]
        %v483 = vld [vmem:[%s2 + $0x10] sm:$0xff]
        %v484 = vld [vmem:[%s2 + $0x18] sm:$0xff]
        %v485 = vld [vmem:[%s3] sm:$0xff]
        %v486 = vld [vmem:[%s3 + $0x8] sm:$0xff]
        %v487 = vld [vmem:[%s3 + $0x10] sm:$0xff]
        %v488 = vld [vmem:[%s3 + $0x18] sm:$0xff]
        %490 = vset.pattern.permute.xlu0 0
        %491 = vperm.xlu0 %490, %v485
        %v492 = vpop.permute.xlu0 %491
        %495 = vset.pattern.permute.xlu0 0
        %496 = vperm.xlu0 %495, %v486
        %v497 = vpop.permute.xlu0 %496
        %500 = vset.pattern.permute.xlu0 0
        %501 = vperm.xlu0 %500, %v487
        %v502 = vpop.permute.xlu0 %501
        %505 = vset.pattern.permute.xlu0 0
        %506 = vperm.xlu0 %505, %v488
        %v507 = vpop.permute.xlu0 %506
        %vm509 = vcmask 130048
        %v511 = vsel %vm509, %v481, 0
        %v514 = vsel %vm509, %v482, 0
        %v517 = vsel %vm509, %v483, 0
        %v520 = vsel %vm509, %v484, 0
        %522 = vmatprep.subr.mxu0 %v478
        %523 = vmatpush1.msra.mxu0 %v477
        %524 = vmatprep.subr.mxu0 %v480
        %525 = vmatpush1.msra.mxu0 %v479
        %526 = vmatprep.subr.mxu0 0.0
        %527 = vmatpush1.msra.mxu0 0.0
        %528 = vmatprep.subr.mxu0 0.0
        %529 = vmatpush1.msra.mxu0 0.0
        %530 = vmatprep.subr.mxu0 0.0
        %531 = vmatpush1.msra.mxu0 0.0
        %532 = vmatprep.subr.mxu0 0.0
        %533 = vmatpush1.msra.mxu0 0.0
        %534 = vmatprep.subr.mxu0 0.0
        %535 = vmatpush1.msra.mxu0 0.0
        %536 = vmatprep.subr.mxu0 0.0
        %537 = vmatpush1.msra.mxu0 0.0
        %538 = vmatprep.subr.mxu0 0.0
        %539 = vmatpush1.msra.mxu0 0.0
        %540 = vmatprep.subr.mxu0 0.0
        %541 = vmatpush1.msra.mxu0 0.0
        %542 = vmatprep.subr.mxu0 0.0
        %543 = vmatpush1.msra.mxu0 0.0
        %544 = vmatprep.subr.mxu0 0.0
        %545 = vmatpush1.msra.mxu0 0.0
        %546 = vmatprep.subr.mxu0 0.0
        %547 = vmatpush1.msra.mxu0 0.0
        %548 = vmatprep.subr.mxu0 0.0
        %549 = vmatpush1.msra.mxu0 0.0
        %550 = vmatprep.subr.mxu0 0.0
        %551 = vmatpush1.msra.mxu0 0.0
        %552 = vmatprep.subr.mxu0 0.0
        %553 = vmatpush1.msra.mxu0 0.0
        %554 = vmatprep.subr.mxu0 0.0
        %555 = vmatpush1.msra.mxu0 0.0
        %556 = vmatprep.subr.mxu0 0.0
        %557 = vmatpush1.msra.mxu0 0.0
        %558 = vmatprep.subr.mxu0 0.0
        %559 = vmatpush1.msra.mxu0 0.0
        %560 = vmatprep.subr.mxu0 0.0
        %561 = vmatpush1.msra.mxu0 0.0
        %562 = vmatprep.subr.mxu0 0.0
        %563 = vmatpush1.msra.mxu0 0.0
        %564 = vmatprep.subr.mxu0 0.0
        %565 = vmatpush1.msra.mxu0 0.0
        %566 = vmatprep.subr.mxu0 0.0
        %567 = vmatpush1.msra.mxu0 0.0
        %568 = vmatprep.subr.mxu0 0.0
        %569 = vmatpush1.msra.mxu0 0.0
        %570 = vmatprep.subr.mxu0 0.0
        %571 = vmatpush1.msra.mxu0 0.0
        %572 = vmatprep.subr.mxu0 0.0
        %573 = vmatpush1.msra.mxu0 0.0
        %574 = vmatprep.subr.mxu0 0.0
        %575 = vmatpush1.msra.mxu0 0.0
        %576 = vmatprep.subr.mxu0 0.0
        %577 = vmatpush1.msra.mxu0 0.0
        %578 = vmatprep.subr.mxu0 0.0
        %579 = vmatpush1.msra.mxu0 0.0
        %580 = vmatprep.subr.mxu0 0.0
        %581 = vmatpush1.msra.mxu0 0.0
        %582 = vmatprep.subr.mxu0 0.0
        %583 = vmatpush1.msra.mxu0 0.0
        %584 = vmatprep.subr.mxu0 0.0
        %585 = vmatpush1.msra.mxu0 0.0
        %586 = vmatprep.mubr.f32.mxu0 0.0
        %587 = vmatmul.mubr.f32.gmra.mrb[0].mxu0 %v511
        %v588 = vpop.f32.mrb[0].mxu0
        %v589 = vadd.f32 %v492, %v588
        %v590 = vpop.f32.mrb[0].mxu0
        %v591 = vadd.f32 %v492, %v590
        %592 = vmatprep.mubr.f32.mxu0 0.0
        %593 = vmatmul.mubr.f32.gmra.mrb[0].mxu0 %v514
        %v594 = vpop.f32.mrb[0].mxu0
        %v595 = vadd.f32 %v497, %v594
        %v596 = vpop.f32.mrb[0].mxu0
        %v597 = vadd.f32 %v497, %v596
        %598 = vmatprep.mubr.f32.mxu0 0.0
        %599 = vmatmul.mubr.f32.gmra.mrb[0].mxu0 %v517
        %v600 = vpop.f32.mrb[0].mxu0
        %v601 = vadd.f32 %v502, %v600
        %v602 = vpop.f32.mrb[0].mxu0
        %v603 = vadd.f32 %v502, %v602
        %604 = vmatprep.mubr.f32.mxu0 0.0
        %605 = vmatmul.mubr.f32.gmra.mrb[0].mxu0 %v520
        %v606 = vpop.f32.mrb[0].mxu0
        %v607 = vadd.f32 %v507, %v606
        %v608 = vpop.f32.mrb[0].mxu0
        %v609 = vadd.f32 %v507, %v608
        %610 = vdwg.mxu0
        %v611 = vmul.f32 %v589, 0.5
        %v612 = vmul.f32 %v591, 0.5
        %v613 = vmul.f32 %v595, 0.5
        %v614 = vmul.f32 %v597, 0.5
        %v615 = vmul.f32 %v601, 0.5
        %v616 = vmul.f32 %v603, 0.5
        %v617 = vmul.f32 %v607, 0.5
        %v618 = vmul.f32 %v609, 0.5
        %v619 = vmul.f32 %v589, 0.70710677
        %v620 = vmul.f32 %v591, 0.70710677
        %v621 = vmul.f32 %v595, 0.70710677
        %v622 = vmul.f32 %v597, 0.70710677
        %v623 = vmul.f32 %v601, 0.70710677
        %v624 = vmul.f32 %v603, 0.70710677
        %v625 = vmul.f32 %v607, 0.70710677
        %v626 = vmul.f32 %v609, 0.70710677
        %v627 = verf.f32.pop %v619
        %v628 = verf.f32.pop %v620
        %v629 = verf.f32.pop %v621
        %v630 = verf.f32.pop %v622
        %v631 = verf.f32.pop %v623
        %v632 = verf.f32.pop %v624
        %v633 = verf.f32.pop %v625
        %v634 = verf.f32.pop %v626
        %v635 = vadd.f32 %v627, 1.0
        %v636 = vadd.f32 %v628, 1.0
        %v637 = vadd.f32 %v629, 1.0
        %v638 = vadd.f32 %v630, 1.0
        %v639 = vadd.f32 %v631, 1.0
        %v640 = vadd.f32 %v632, 1.0
        %v641 = vadd.f32 %v633, 1.0
        %v642 = vadd.f32 %v634, 1.0
        %v643 = vmul.f32 %v611, %v635
        %v644 = vmul.f32 %v612, %v636
        %v645 = vmul.f32 %v613, %v637
        %v646 = vmul.f32 %v614, %v638
        %v647 = vmul.f32 %v615, %v639
        %v648 = vmul.f32 %v616, %v640
        %v649 = vmul.f32 %v617, %v641
        %v650 = vmul.f32 %v618, %v642
        %v651 = vld [vmem:[%s472] sm:$0xff]
        %v652 = vld [vmem:[%s472 + $0x8] sm:$0xff]
        %v653 = vld [vmem:[%s472 + $0x10] sm:$0xff]
        %v654 = vld [vmem:[%s472 + $0x18] sm:$0xff]
        %v655 = vld [vmem:[%s472 + $0x20] sm:$0xff]
        %v656 = vld [vmem:[%s472 + $0x28] sm:$0xff]
        %v657 = vld [vmem:[%s472 + $0x30] sm:$0xff]
        %v658 = vld [vmem:[%s472 + $0x38] sm:$0xff]
        %v659 = vmul.f32 %v651, 0.5
        %v660 = vmul.f32 %v652, 0.5
        %v661 = vmul.f32 %v653, 0.5
        %v662 = vmul.f32 %v654, 0.5
        %v663 = vmul.f32 %v655, 0.5
        %v664 = vmul.f32 %v656, 0.5
        %v665 = vmul.f32 %v657, 0.5
        %v666 = vmul.f32 %v658, 0.5
        %v667 = vmul.f32 %v651, 0.70710677
        %v668 = vmul.f32 %v652, 0.70710677
        %v669 = vmul.f32 %v653, 0.70710677
        %v670 = vmul.f32 %v654, 0.70710677
        %v671 = vmul.f32 %v655, 0.70710677
        %v672 = vmul.f32 %v656, 0.70710677
        %v673 = vmul.f32 %v657, 0.70710677
        %v674 = vmul.f32 %v658, 0.70710677
        %v675 = verf.f32.pop %v667
        %v676 = verf.f32.pop %v668
        %v677 = verf.f32.pop %v669
        %v678 = verf.f32.pop %v670
        %v679 = verf.f32.pop %v671
        %v680 = verf.f32.pop %v672
        %v681 = verf.f32.pop %v673
        %v682 = verf.f32.pop %v674
        %v683 = vadd.f32 %v675, 1.0
        %v684 = vadd.f32 %v676, 1.0
        %v685 = vadd.f32 %v677, 1.0
        %v686 = vadd.f32 %v678, 1.0
        %v687 = vadd.f32 %v679, 1.0
        %v688 = vadd.f32 %v680, 1.0
        %v689 = vadd.f32 %v681, 1.0
        %v690 = vadd.f32 %v682, 1.0
        %v691 = vmul.f32 %v659, %v683
        %v692 = vmul.f32 %v660, %v684
        %v693 = vmul.f32 %v661, %v685
        %v694 = vmul.f32 %v662, %v686
        %v695 = vmul.f32 %v663, %v687
        %v696 = vmul.f32 %v664, %v688
        %v697 = vmul.f32 %v665, %v689
        %v698 = vmul.f32 %v666, %v690
        %v699 = vld [vmem:[#allocation5] sm:$0xff]
        %v700 = vld [vmem:[#allocation5 + $0x8] sm:$0xff]
        %v701 = vld [vmem:[#allocation5 + $0x10] sm:$0xff]
        %v702 = vld [vmem:[#allocation5 + $0x18] sm:$0xff]
        %v703 = vld [vmem:[#allocation7] sm:$0xff]
        %v704 = vld [vmem:[#allocation7 + $0x8] sm:$0xff]
        %v705 = vld [vmem:[#allocation7 + $0x10] sm:$0xff]
        %v706 = vld [vmem:[#allocation7 + $0x18] sm:$0xff]
        %vm707 = vcmask 261120
        %v709 = vsel %vm707, %v703, 0
        %v712 = vsel %vm707, %v704, 0
        %v715 = vsel %vm707, %v705, 0
        %v718 = vsel %vm707, %v706, 0
        %720 = vmatprep.subr.mxu0 %v692
        %721 = vmatpush1.msra.mxu0 %v691
        %722 = vmatprep.subr.mxu0 %v694
        %723 = vmatpush1.msra.mxu0 %v693
        %724 = vmatprep.subr.mxu0 %v696
        %725 = vmatpush1.msra.mxu0 %v695
        %726 = vmatprep.subr.mxu0 %v698
        %727 = vmatpush1.msra.mxu0 %v697
        %728 = vmatprep.subr.mxu0 0.0
        %729 = vmatpush1.msra.mxu0 0.0
        %730 = vmatprep.subr.mxu0 0.0
        %731 = vmatpush1.msra.mxu0 0.0
        %732 = vmatprep.subr.mxu0 0.0
        %733 = vmatpush1.msra.mxu0 0.0
        %734 = vmatprep.subr.mxu0 0.0
        %735 = vmatpush1.msra.mxu0 0.0
        %736 = vmatprep.subr.mxu0 0.0
        %737 = vmatpush1.msra.mxu0 0.0
        %738 = vmatprep.subr.mxu0 0.0
        %739 = vmatpush1.msra.mxu0 0.0
        %740 = vmatprep.subr.mxu0 0.0
        %741 = vmatpush1.msra.mxu0 0.0
        %742 = vmatprep.subr.mxu0 0.0
        %743 = vmatpush1.msra.mxu0 0.0
        %744 = vmatprep.subr.mxu0 0.0
        %745 = vmatpush1.msra.mxu0 0.0
        %746 = vmatprep.subr.mxu0 0.0
        %747 = vmatpush1.msra.mxu0 0.0
        %748 = vmatprep.subr.mxu0 0.0
        %749 = vmatpush1.msra.mxu0 0.0
        %750 = vmatprep.subr.mxu0 0.0
        %751 = vmatpush1.msra.mxu0 0.0
        %752 = vmatprep.subr.mxu0 0.0
        %753 = vmatpush1.msra.mxu0 0.0
        %754 = vmatprep.subr.mxu0 0.0
        %755 = vmatpush1.msra.mxu0 0.0
        %756 = vmatprep.subr.mxu0 0.0
        %757 = vmatpush1.msra.mxu0 0.0
        %758 = vmatprep.subr.mxu0 0.0
        %759 = vmatpush1.msra.mxu0 0.0
        %760 = vmatprep.subr.mxu0 0.0
        %761 = vmatpush1.msra.mxu0 0.0
        %762 = vmatprep.subr.mxu0 0.0
        %763 = vmatpush1.msra.mxu0 0.0
        %764 = vmatprep.subr.mxu0 0.0
        %765 = vmatpush1.msra.mxu0 0.0
        %766 = vmatprep.subr.mxu0 0.0
        %767 = vmatpush1.msra.mxu0 0.0
        %768 = vmatprep.subr.mxu0 0.0
        %769 = vmatpush1.msra.mxu0 0.0
        %770 = vmatprep.subr.mxu0 0.0
        %771 = vmatpush1.msra.mxu0 0.0
        %772 = vmatprep.subr.mxu0 0.0
        %773 = vmatpush1.msra.mxu0 0.0
        %774 = vmatprep.subr.mxu0 0.0
        %775 = vmatpush1.msra.mxu0 0.0
        %776 = vmatprep.subr.mxu0 0.0
        %777 = vmatpush1.msra.mxu0 0.0
        %778 = vmatprep.subr.mxu0 0.0
        %779 = vmatpush1.msra.mxu0 0.0
        %780 = vmatprep.subr.mxu0 0.0
        %781 = vmatpush1.msra.mxu0 0.0
        %782 = vmatprep.subr.mxu0 0.0
        %783 = vmatpush1.msra.mxu0 0.0
        %784 = vmatprep.mubr.f32.mxu0 0.0
        %785 = vmatmul.mubr.f32.gmra.mrb[0].mxu0 %v709
        %v786 = vpop.f32.mrb[0].mxu0
        %v787 = vadd.f32 0.0, %v786
        %v788 = vpop.f32.mrb[0].mxu0
        %v789 = vadd.f32 0.0, %v788
        %790 = vmatprep.mubr.f32.mxu0 0.0
        %791 = vmatmul.mubr.f32.gmra.mrb[0].mxu0 %v712
        %v792 = vpop.f32.mrb[0].mxu0
        %v793 = vadd.f32 0.0, %v792
        %v794 = vpop.f32.mrb[0].mxu0
        %v795 = vadd.f32 0.0, %v794
        %796 = vmatprep.mubr.f32.mxu0 0.0
        %797 = vmatmul.mubr.f32.gmra.mrb[0].mxu0 %v715
        %v798 = vpop.f32.mrb[0].mxu0
        %v799 = vadd.f32 0.0, %v798
        %v800 = vpop.f32.mrb[0].mxu0
        %v801 = vadd.f32 0.0, %v800
        %802 = vmatprep.mubr.f32.mxu0 0.0
        %803 = vmatmul.mubr.f32.gmra.mrb[0].mxu0 %v718
        %v804 = vpop.f32.mrb[0].mxu0
        %v805 = vadd.f32 0.0, %v804
        %v806 = vpop.f32.mrb[0].mxu0
        %v807 = vadd.f32 0.0, %v806
        %808 = vdwg.mxu0
        %v810 = vsel %vm707, %v699, 0
        %v813 = vsel %vm707, %v700, 0
        %v816 = vsel %vm707, %v701, 0
        %v819 = vsel %vm707, %v702, 0
        %821 = vmatprep.subr.mxu0 %v644
        %822 = vmatpush1.msra.mxu0 %v643
        %823 = vmatprep.subr.mxu0 %v646
        %824 = vmatpush1.msra.mxu0 %v645
        %825 = vmatprep.subr.mxu0 %v648
        %826 = vmatpush1.msra.mxu0 %v647
        %827 = vmatprep.subr.mxu0 %v650
        %828 = vmatpush1.msra.mxu0 %v649
        %829 = vmatprep.subr.mxu0 0.0
        %830 = vmatpush1.msra.mxu0 0.0
        %831 = vmatprep.subr.mxu0 0.0
        %832 = vmatpush1.msra.mxu0 0.0
        %833 = vmatprep.subr.mxu0 0.0
        %834 = vmatpush1.msra.mxu0 0.0
        %835 = vmatprep.subr.mxu0 0.0
        %836 = vmatpush1.msra.mxu0 0.0
        %837 = vmatprep.subr.mxu0 0.0
        %838 = vmatpush1.msra.mxu0 0.0
        %839 = vmatprep.subr.mxu0 0.0
        %840 = vmatpush1.msra.mxu0 0.0
        %841 = vmatprep.subr.mxu0 0.0
        %842 = vmatpush1.msra.mxu0 0.0
        %843 = vmatprep.subr.mxu0 0.0
        %844 = vmatpush1.msra.mxu0 0.0
        %845 = vmatprep.subr.mxu0 0.0
        %846 = vmatpush1.msra.mxu0 0.0
        %847 = vmatprep.subr.mxu0 0.0
        %848 = vmatpush1.msra.mxu0 0.0
        %849 = vmatprep.subr.mxu0 0.0
        %850 = vmatpush1.msra.mxu0 0.0
        %851 = vmatprep.subr.mxu0 0.0
        %852 = vmatpush1.msra.mxu0 0.0
        %853 = vmatprep.subr.mxu0 0.0
        %854 = vmatpush1.msra.mxu0 0.0
        %855 = vmatprep.subr.mxu0 0.0
        %856 = vmatpush1.msra.mxu0 0.0
        %857 = vmatprep.subr.mxu0 0.0
        %858 = vmatpush1.msra.mxu0 0.0
        %859 = vmatprep.subr.mxu0 0.0
        %860 = vmatpush1.msra.mxu0 0.0
        %861 = vmatprep.subr.mxu0 0.0
        %862 = vmatpush1.msra.mxu0 0.0
        %863 = vmatprep.subr.mxu0 0.0
        %864 = vmatpush1.msra.mxu0 0.0
        %865 = vmatprep.subr.mxu0 0.0
        %866 = vmatpush1.msra.mxu0 0.0
        %867 = vmatprep.subr.mxu0 0.0
        %868 = vmatpush1.msra.mxu0 0.0
        %869 = vmatprep.subr.mxu0 0.0
        %870 = vmatpush1.msra.mxu0 0.0
        %871 = vmatprep.subr.mxu0 0.0
        %872 = vmatpush1.msra.mxu0 0.0
        %873 = vmatprep.subr.mxu0 0.0
        %874 = vmatpush1.msra.mxu0 0.0
        %875 = vmatprep.subr.mxu0 0.0
        %876 = vmatpush1.msra.mxu0 0.0
        %877 = vmatprep.subr.mxu0 0.0
        %878 = vmatpush1.msra.mxu0 0.0
        %879 = vmatprep.subr.mxu0 0.0
        %880 = vmatpush1.msra.mxu0 0.0
        %881 = vmatprep.subr.mxu0 0.0
        %882 = vmatpush1.msra.mxu0 0.0
        %883 = vmatprep.subr.mxu0 0.0
        %884 = vmatpush1.msra.mxu0 0.0
        %885 = vmatprep.mubr.f32.mxu0 0.0
        %886 = vmatmul.mubr.f32.gmra.mrb[0].mxu0 %v810
        %v887 = vpop.f32.mrb[0].mxu0
        %v888 = vadd.f32 %v787, %v887
        %v889 = vpop.f32.mrb[0].mxu0
        %v890 = vadd.f32 %v789, %v889
        %891 = vmatprep.mubr.f32.mxu0 0.0
        %892 = vmatmul.mubr.f32.gmra.mrb[0].mxu0 %v813
        %v893 = vpop.f32.mrb[0].mxu0
        %v894 = vadd.f32 %v793, %v893
        %v895 = vpop.f32.mrb[0].mxu0
        %v896 = vadd.f32 %v795, %v895
        %897 = vmatprep.mubr.f32.mxu0 0.0
        %898 = vmatmul.mubr.f32.gmra.mrb[0].mxu0 %v816
        %v899 = vpop.f32.mrb[0].mxu0
        %v900 = vadd.f32 %v799, %v899
        %v901 = vpop.f32.mrb[0].mxu0
        %v902 = vadd.f32 %v801, %v901
        %903 = vmatprep.mubr.f32.mxu0 0.0
        %904 = vmatmul.mubr.f32.gmra.mrb[0].mxu0 %v819
        %v905 = vpop.f32.mrb[0].mxu0
        %v906 = vadd.f32 %v805, %v905
        %v907 = vpop.f32.mrb[0].mxu0
        %v908 = vadd.f32 %v807, %v907
        %909 = vdwg.mxu0
        %v910 = vld [vmem:[%s6] sm:$0xff]
        %v911 = vld [vmem:[%s6 + $0x8] sm:$0xff]
        %v912 = vld [vmem:[%s6 + $0x10] sm:$0xff]
        %v913 = vld [vmem:[%s6 + $0x18] sm:$0xff]
        %915 = vset.pattern.permute.xlu0 0
        %916 = vperm.xlu0 %915, %v910
        %v917 = vpop.permute.xlu0 %916
        %920 = vset.pattern.permute.xlu0 0
        %921 = vperm.xlu0 %920, %v911
        %v922 = vpop.permute.xlu0 %921
        %925 = vset.pattern.permute.xlu0 0
        %926 = vperm.xlu0 %925, %v912
        %v927 = vpop.permute.xlu0 %926
        %930 = vset.pattern.permute.xlu0 0
        %931 = vperm.xlu0 %930, %v913
        %v932 = vpop.permute.xlu0 %931
        %v934 = vadd.f32 %v888, %v917
        %v935 = vadd.f32 %v890, %v917
        %v936 = vadd.f32 %v894, %v922
        %v937 = vadd.f32 %v896, %v922
        %v938 = vadd.f32 %v900, %v927
        %v939 = vadd.f32 %v902, %v927
        %v940 = vadd.f32 %v906, %v932
        %v941 = vadd.f32 %v908, %v932
        %v942 = vld [vmem:[%s7] sm:$0xff]
        %v943 = vld [vmem:[%s7 + $0x8] sm:$0xff]
        %v944 = vld [vmem:[%s8] sm:$0xff]
        %v945 = vld [vmem:[%s8 + $0x8] sm:$0xff]
        %947 = vset.pattern.permute.xlu0 0
        %948 = vperm.xlu0 %947, %v944
        %v949 = vpop.permute.xlu0 %948
        %952 = vset.pattern.permute.xlu0 0
        %953 = vperm.xlu0 %952, %v945
        %v954 = vpop.permute.xlu0 %953
        %v957 = vsel %vm707, %v942, 0
        %v960 = vsel %vm707, %v943, 0
        %962 = vmatprep.subr.mxu0 %v935
        %963 = vmatpush1.msra.mxu0 %v934
        %964 = vmatprep.subr.mxu0 %v937
        %965 = vmatpush1.msra.mxu0 %v936
        %966 = vmatprep.subr.mxu0 %v939
        %967 = vmatpush1.msra.mxu0 %v938
        %968 = vmatprep.subr.mxu0 %v941
        %969 = vmatpush1.msra.mxu0 %v940
        %970 = vmatprep.subr.mxu0 0.0
        %971 = vmatpush1.msra.mxu0 0.0
        %972 = vmatprep.subr.mxu0 0.0
        %973 = vmatpush1.msra.mxu0 0.0
        %974 = vmatprep.subr.mxu0 0.0
        %975 = vmatpush1.msra.mxu0 0.0
        %976 = vmatprep.subr.mxu0 0.0
        %977 = vmatpush1.msra.mxu0 0.0
        %978 = vmatprep.subr.mxu0 0.0
        %979 = vmatpush1.msra.mxu0 0.0
        %980 = vmatprep.subr.mxu0 0.0
        %981 = vmatpush1.msra.mxu0 0.0
        %982 = vmatprep.subr.mxu0 0.0
        %983 = vmatpush1.msra.mxu0 0.0
        %984 = vmatprep.subr.mxu0 0.0
        %985 = vmatpush1.msra.mxu0 0.0
        %986 = vmatprep.subr.mxu0 0.0
        %987 = vmatpush1.msra.mxu0 0.0
        %988 = vmatprep.subr.mxu0 0.0
        %989 = vmatpush1.msra.mxu0 0.0
        %990 = vmatprep.subr.mxu0 0.0
        %991 = vmatpush1.msra.mxu0 0.0
        %992 = vmatprep.subr.mxu0 0.0
        %993 = vmatpush1.msra.mxu0 0.0
        %994 = vmatprep.subr.mxu0 0.0
        %995 = vmatpush1.msra.mxu0 0.0
        %996 = vmatprep.subr.mxu0 0.0
        %997 = vmatpush1.msra.mxu0 0.0
        %998 = vmatprep.subr.mxu0 0.0
        %999 = vmatpush1.msra.mxu0 0.0
        %1000 = vmatprep.subr.mxu0 0.0
        %1001 = vmatpush1.msra.mxu0 0.0
        %1002 = vmatprep.subr.mxu0 0.0
        %1003 = vmatpush1.msra.mxu0 0.0
        %1004 = vmatprep.subr.mxu0 0.0
        %1005 = vmatpush1.msra.mxu0 0.0
        %1006 = vmatprep.subr.mxu0 0.0
        %1007 = vmatpush1.msra.mxu0 0.0
        %1008 = vmatprep.subr.mxu0 0.0
        %1009 = vmatpush1.msra.mxu0 0.0
        %1010 = vmatprep.subr.mxu0 0.0
        %1011 = vmatpush1.msra.mxu0 0.0
        %1012 = vmatprep.subr.mxu0 0.0
        %1013 = vmatpush1.msra.mxu0 0.0
        %1014 = vmatprep.subr.mxu0 0.0
        %1015 = vmatpush1.msra.mxu0 0.0
        %1016 = vmatprep.subr.mxu0 0.0
        %1017 = vmatpush1.msra.mxu0 0.0
        %1018 = vmatprep.subr.mxu0 0.0
        %1019 = vmatpush1.msra.mxu0 0.0
        %1020 = vmatprep.subr.mxu0 0.0
        %1021 = vmatpush1.msra.mxu0 0.0
        %1022 = vmatprep.subr.mxu0 0.0
        %1023 = vmatpush1.msra.mxu0 0.0
        %1024 = vmatprep.subr.mxu0 0.0
        %1025 = vmatpush1.msra.mxu0 0.0
        %1026 = vmatprep.mubr.f32.mxu0 0.0
        %1027 = vmatmul.mubr.f32.gmra.mrb[0].mxu0 %v957
        %v1028 = vpop.f32.mrb[0].mxu0
        %v1029 = vadd.f32 %v949, %v1028
        %v1030 = vpop.f32.mrb[0].mxu0
        %v1031 = vadd.f32 %v949, %v1030
        %1032 = vmatprep.mubr.f32.mxu0 0.0
        %1033 = vmatmul.mubr.f32.gmra.mrb[0].mxu0 %v960
        %v1034 = vpop.f32.mrb[0].mxu0
        %v1035 = vadd.f32 %v954, %v1034
        %v1036 = vpop.f32.mrb[0].mxu0
        %v1037 = vadd.f32 %v954, %v1036
        %1038 = vdwg.mxu0
        %v1039 = vadd.f32 %v1029, %v477
        %v1040 = vadd.f32 %v1031, %v478
        %v1041 = vadd.f32 %v1035, %v479
        %v1042 = vadd.f32 %v1037, %v480
        %v1043 = vmul.f32 %v1039, 0.5
        %v1044 = vmul.f32 %v1040, 0.5
        %v1045 = vmul.f32 %v1041, 0.5
        %v1046 = vmul.f32 %v1042, 0.5
        %v1047 = vmul.f32 %v1039, 0.70710677
        %v1048 = vmul.f32 %v1040, 0.70710677
        %v1049 = vmul.f32 %v1041, 0.70710677
        %v1050 = vmul.f32 %v1042, 0.70710677
        %v1051 = verf.f32.pop %v1047
        %v1052 = verf.f32.pop %v1048
        %v1053 = verf.f32.pop %v1049
        %v1054 = verf.f32.pop %v1050
        %v1055 = vadd.f32 %v1051, 1.0
        %v1056 = vadd.f32 %v1052, 1.0
        %v1057 = vadd.f32 %v1053, 1.0
        %v1058 = vadd.f32 %v1054, 1.0
        %v1059 = vmul.f32 %v1043, %v1055
        %v1060 = vmul.f32 %v1044, %v1056
        %v1061 = vmul.f32 %v1045, %v1057
        %v1062 = vmul.f32 %v1046, %v1058
        %1063 = vst [vmem:[%s456] sm:$0xff] %v934
        %1064 = vst [vmem:[%s456 + $0x8] sm:$0xff] %v935
        %1065 = vst [vmem:[%s456 + $0x10] sm:$0xff] %v936
        %1066 = vst [vmem:[%s456 + $0x18] sm:$0xff] %v937
        %1067 = vst [vmem:[%s456 + $0x20] sm:$0xff] %v938
        %1068 = vst [vmem:[%s456 + $0x28] sm:$0xff] %v939
        %1069 = vst [vmem:[%s456 + $0x30] sm:$0xff] %v940
        %1070 = vst [vmem:[%s456 + $0x38] sm:$0xff] %v941
        %1071 = vst [vmem:[%s463] sm:$0xff] %v1059
        %1072 = vst [vmem:[%s463 + $0x8] sm:$0xff] %v1060
        %1073 = vst [vmem:[%s463 + $0x10] sm:$0xff] %v1061
        %1074 = vst [vmem:[%s463 + $0x18] sm:$0xff] %v1062
        %s1075 = sand.u32 %s257, 1
        %s1076 = scalar_lea.sflag [#allocation4], %s1075
        %s1077 = sand.u32 %s257, 1
        %s1078 = smul.addr %s1077, 64
        %s1079 = scalar_lea.vmem [#allocation8], %s1078
        %s1080 = sand.u32 %s285, 1
        %s1081 = scalar_lea.sflag [#allocation10], %s1080
        %s1082 = sand.u32 %s285, 1
        %s1083 = smul.addr %s1082, 32
        %s1084 = scalar_lea.vmem [#allocation9], %s1083
        // Predicated region
        $region69: #{tpu_custom_call.1} parent=55 // pred_check
          %p1085 = pneg %p267
        $region70: #{tpu_custom_call.1} parent=55 // pred_check_branch
          %1087 = sbr.rel (%p1085) target = $region72
        $region71: #{tpu_custom_call.1} parent=55 // pred_region
          %s1088 = smul.u32 2, %s37
          %s1090 = ssub.s32 1024, 1024
          %1091 = vsyncadd %s1076, %s1090
          %s1092 = smul.addr %s36, 8
          %s1093 = sadd.s32 %s1088, %s1092
          %s1094 = smul.addr %s1093, 128
          %s1095 = scalar_lea.hbm %s9, %s1094
          %s1096 = sshll.u32 %s1079, 4
          %s1097 = int_to_ptr.vmem [resolvable:$true] %s1096
          %1102 = dma.vmem_to_hbm [thread:$0]  %s1097, 1024, %s1095, %s1076, 256, 256, 16
        $region72: #{tpu_custom_call.1} parent=55 // pred_fallthru
          _
        // Predicated region
        $region73: #{tpu_custom_call.1} parent=55 // pred_check
          %p1103 = pneg %p295
        $region74: #{tpu_custom_call.1} parent=55 // pred_check_branch
          %1105 = sbr.rel (%p1103) target = $region76
        $region75: #{tpu_custom_call.1} parent=55 // pred_region
          %s1106 = smul.u32 2, %s37
          %s1108 = ssub.s32 512, 512
          %1109 = vsyncadd %s1081, %s1108
          %s1110 = smul.addr %s36, 4
          %s1111 = sadd.s32 %s1106, %s1110
          %s1112 = smul.addr %s1111, 128
          %s1113 = scalar_lea.hbm %s10, %s1112
          %s1114 = sshll.u32 %s1084, 4
          %s1115 = int_to_ptr.vmem [resolvable:$true] %s1114
          %1120 = dma.vmem_to_hbm [thread:$0]  %s1115, 512, %s1113, %s1081, 256, 256, 16
        $region76: #{tpu_custom_call.1} parent=55 // pred_fallthru
          _
      $region56: #{tpu_custom_call.1} parent=5 // pred_fallthru
        _
      %p1121 = scmp.le.s32.totalorder 2, %s27
      // Predicated region
      $region77: #{tpu_custom_call.1} parent=5 // pred_check
        %p1122 = pneg %p1121
      $region78: #{tpu_custom_call.1} parent=5 // pred_check_branch
        %1124 = sbr.rel (%p1122) target = $region80
      $region79: #{tpu_custom_call.1} parent=5 // pred_region
        %s1125 = ssub.s32 %s27, 2
        // Predicated region
        $region81: #{tpu_custom_call.1} parent=79 // pred_check
          %p1126 = pneg %p273
        $region82: #{tpu_custom_call.1} parent=79 // pred_check_branch
          %1128 = sbr.rel (%p1126) target = $region84
        $region83: #{tpu_custom_call.1} parent=79 // pred_region
          %s1129 = sand.u32 %s258, 1
          %s1130 = scalar_lea.sflag [#allocation4], %s1129
          %s1131 = sand.u32 %s258, 1
          %s1132 = smul.addr %s1131, 64
          %s1133 = scalar_lea.vmem [#allocation8], %s1132
          %1134 = dma.done %s1130, 1024
        $region84: #{tpu_custom_call.1} parent=79 // pred_fallthru
          _
        // Predicated region
        $region85: #{tpu_custom_call.1} parent=79 // pred_check
          %p1135 = pneg %p301
        $region86: #{tpu_custom_call.1} parent=79 // pred_check_branch
          %1137 = sbr.rel (%p1135) target = $region88
        $region87: #{tpu_custom_call.1} parent=79 // pred_region
          %s1138 = sand.u32 %s286, 1
          %s1139 = scalar_lea.sflag [#allocation10], %s1138
          %s1140 = sand.u32 %s286, 1
          %s1141 = smul.addr %s1140, 32
          %s1142 = scalar_lea.vmem [#allocation9], %s1141
          %1143 = dma.done %s1139, 512
        $region88: #{tpu_custom_call.1} parent=79 // pred_fallthru
          _
      $region80: #{tpu_custom_call.1} parent=5 // pred_fallthru
        _
    $region6: #{tpu_custom_call.1} parent=1 // loop_footer
      %s31 = sadd.s32 1, %s27
    $region7: #{tpu_custom_call.1} parent=1 // loop_footer_branch
      %26 = sbr.rel target = $region3
    $region8: #{tpu_custom_call.1} parent=1 // loop_exit
      _
    %1144 = vsyncpa [#allocation3], 1
    %s1145 = scalar_lea.sflag [#allocation3], 1
    %1146 = vsyncpa %s1145, 1
    %1147 = vsyncpa [#allocation6], 1
    %1148 = vsyncpa [#allocation4], 1
    %s1149 = scalar_lea.sflag [#allocation4], 1
    %1150 = vsyncpa %s1149, 1
    %1151 = vsyncpa [#allocation10], 1
    %s1152 = scalar_lea.sflag [#allocation10], 1
    %1153 = vsyncpa %s1152, 1

</llo_original>
